<compile_context>
chip_gen: v5e
topology: v5e:2x2
jax: 0.10.0
libtpu: 0.0.40
codegen_flags: <defaults>
</compile_context>

<pallas_src>
import functools

import jax
import jax.numpy as jnp
import numpy as np
from jax.experimental import pallas as pl
from jax.experimental.pallas import tpu as pltpu


def _gat_kernel(x_ref, ids_ref, adj_ref, gmask_ref, emb_ref, wqkv_ref,
                bqkv_ref, masks_ref, wg_ref, bg_ref, o_ref, *,
                heads, c_out, num_joints):
    rows = x_ref.shape[0]                       # Bt * N stacked node rows

    # In-kernel embedding gather as a one-hot matmul (MXU-friendly, no HBM emb).
    joint_iota = jax.lax.broadcasted_iota(jnp.int32, (rows, num_joints), 1)
    onehot = (ids_ref[...] == joint_iota).astype(jnp.bfloat16)         # (R, J)
    emb = jnp.dot(onehot, emb_ref[...], preferred_element_type=jnp.float32)
    xe = (x_ref[...].astype(jnp.float32) + emb).astype(jnp.bfloat16)   # (R, C)

    # Fused Q|K|V projection (one MXU matmul, one bias add). 1/sqrt(d) is
    # already folded into the Q columns of wqkv/bqkv.
    qkv = jnp.dot(xe, wqkv_ref[...], preferred_element_type=jnp.float32)
    qkv = qkv + bqkv_ref[...]                                          # (R, 3C)
    c = c_out
    qb = qkv[:, :c].astype(jnp.bfloat16)
    kb = qkv[:, c:2 * c].astype(jnp.bfloat16)
    vb = qkv[:, 2 * c:3 * c].astype(jnp.bfloat16)

    gmask = gmask_ref[...]                      # (R, R): 0 in-graph, -1e30 cross
    dn = (((1,), (1,)), ((), ()))               # contract last dims: q @ k^T

    def head_out(h):
        # Per-head lane mask: masked q lanes are exactly 0, so the full-width
        # contraction equals the per-head d-dim contraction (cheap while C<=128).
        mh = masks_ref[h]                                               # (1, C)
        s = jax.lax.dot_general(qb * mh, kb, dn,
                                preferred_element_type=jnp.float32)     # (R, R)
        s = s + gmask
        s = s - jnp.max(s, axis=-1, keepdims=True)
        e = jnp.exp(s)
        attn = e * pl.reciprocal(jnp.sum(e, axis=-1, keepdims=True), approx=True)
        # dropout(p=0.0) is the identity.
        # attn @ (v*mask_h) lands directly in head-h output columns.
        return jnp.dot(attn.astype(jnp.bfloat16), vb * mh,
                       preferred_element_type=jnp.float32)

    att = head_out(0)                       # peel head 0 (no zero-fill + add)
    for h in range(1, heads):               # static unroll; tiny H
        att = att + head_out(h)
    # TODO(synk): switch to lax.fori_loop(..., unroll=True) with att as carry
    # if heads/N grow enough that per-head (R,R) temporaries cause spills.

    # GCNConv: out = A_hat_blockdiag @ (att @ W_gcn) + b_gcn
    xw = jnp.dot(att.astype(jnp.bfloat16), wg_ref[...],
                 preferred_element_type=jnp.float32)
    o_ref[...] = (jnp.dot(adj_ref[...], xw.astype(jnp.bfloat16),
                          preferred_element_type=jnp.float32) + bg_ref[...])


def _gcn_norm_dense(edge_index, num_nodes):
    """Dense D^-1/2 A D^-1/2 matching torch_geometric gcn_norm (no self loops)."""
    src = edge_index[0]
    dst = edge_index[1]
    a = jnp.zeros((num_nodes, num_nodes), jnp.float32).at[dst, src].add(1.0)
    deg = a.sum(axis=1)                                    # in-degree of targets
    dinv = jnp.where(deg > 0, 1.0 / jnp.sqrt(deg), 0.0)
    return dinv[:, None] * a * dinv[None, :]


def graph_attention_forward(x, edge_index, joint_ids, params, heads,
                            graphs_per_step=None):
    """Batched forward.

    x:          (B, N, C_in)   float32
    edge_index: (B, 2, E)      int32
    joint_ids:  (B, N)         int32
    """
    b, n, c_in = x.shape
    c_out = params["wq"].shape[1]
    # x + joint_embed(joint_ids) only broadcasts if C_in == C_out.
    assert c_in == c_out, "module requires in_channels == out_channels"
    assert c_out % heads == 0
    d = c_out // heads
    inv_scale = 1.0 / float(d ** 0.5)
    num_joints = params["joint_embed"].shape[0]

    if graphs_per_step is None:
        graphs_per_step = b // 2 if (b % 2 == 0 and b >= 2) else b
    bt = graphs_per_step
    assert b % bt == 0
    steps = b // bt
    rows = bt * n                                   # stacked node rows per step

    # ---- wrapper-side glue (weights / adjacency prep, all one-time) ---------
    # Dense normalized adjacency, block-diagonalized per grid step, bf16.
    adj = jax.vmap(_gcn_norm_dense, in_axes=(0, None))(edge_index, n)   # (B,N,N)
    adj_g = adj.reshape(steps, bt, n, n)
    adj_bd = jnp.einsum("sgnm,gh->sgnhm", adj_g, jnp.eye(bt, dtype=adj.dtype))
    adj_bd = adj_bd.reshape(steps * rows, rows).astype(jnp.bfloat16)

    # Additive cross-graph attention mask (0 within graph, -1e30 across).
    gidx = jnp.arange(rows) // n
    gmask = jnp.where(gidx[:, None] == gidx[None, :], 0.0, -1e30)
    gmask = gmask.astype(jnp.float32)

    # Fused Q|K|V weights, 1/sqrt(d) folded into the Q columns (weights + bias).
    wqkv = jnp.concatenate([params["wq"] * inv_scale, params["wk"],
                            params["wv"]], axis=1).astype(jnp.bfloat16)
    bqkv = jnp.concatenate([params["bq"] * inv_scale, params["bk"],
                            params["bv"]], axis=1).astype(jnp.float32)

    # Per-head lane masks: masks[h, 0, j] = 1 iff j in [h*d, (h+1)*d).
    lane = jnp.arange(c_out)
    masks = ((lane[None, :] // d) == jnp.arange(heads)[:, None])
    masks = masks.astype(jnp.bfloat16)[:, None, :]                  # (H, 1, C)

    emb_tab = params["joint_embed"].astype(jnp.bfloat16)            # (J, C)
    wg = params["wg"].astype(jnp.bfloat16)
    bg = params["bg"].astype(jnp.float32)

    x2 = x.reshape(b * n, c_in).astype(jnp.bfloat16)                # (B*N, C)
    ids2 = joint_ids.reshape(b * n, 1).astype(jnp.int32)            # (B*N, 1)

    kernel = functools.partial(_gat_kernel, heads=heads, c_out=c_out,
                               num_joints=num_joints)

    def per_step(block_shape):       # grid-varying row blocks of stacked nodes
        return pl.BlockSpec(block_shape, lambda i: (i, 0))

    def resident(shape):             # weights/masks: constant index_map
        return pl.BlockSpec(shape, lambda i: (0,) * len(shape))

    flops = int(
        2 * b * n * num_joints * c_out            # one-hot embedding gather
        + 2 * b * n * c_in * 3 * c_out            # fused QKV
        + 4 * heads * steps * rows * rows * c_out # scores + attn@V per head
        + 2 * b * n * c_out * c_out               # GCN weight matmul
        + 2 * steps * rows * rows * c_out)        # GCN aggregation
    transcendentals = int(heads * steps * rows * (rows + 1))
    bytes_accessed = int(
        x2.size * 2 + ids2.size * 4 + adj_bd.size * 2 + gmask.size * 4
        + emb_tab.size * 2 + wqkv.size * 2 + bqkv.size * 4 + masks.size * 2
        + wg.size * 2 + bg.size * 4 + b * n * c_out * 4)

    # TODO(synk): for production N, tile adj rows (+ a K-reduction axis with a
    # VMEM f32 accumulator) and stream adj from HBM (Buffered(3)); trigger at
    # ~half the N on v7x (64 MiB VMEM) vs v5e/v6e.
    out2 = pl.pallas_call(
        kernel,
        out_shape=jax.ShapeDtypeStruct((b * n, c_out), jnp.float32),
        grid=(steps,),
        in_specs=[
            per_step((rows, c_in)),              # x  (stacked rows, bf16)
            per_step((rows, 1)),                 # joint ids
            per_step((rows, rows)),              # block-diag normalized adj
            resident((rows, rows)),              # cross-graph score mask
            resident((num_joints, c_out)),       # joint embedding table
            resident((c_in, 3 * c_out)),         # fused W_qkv (Q pre-scaled)
            resident((1, 3 * c_out)),            # fused b_qkv
            resident((heads, 1, c_out)),         # per-head lane masks
            resident((c_out, c_out)),            # W_gcn
            resident((1, c_out)),                # b_gcn
        ],
        out_specs=per_step((rows, c_out)),       # lane-dense: c_out % 128 == 0
        compiler_params=pltpu.CompilerParams(
            dimension_semantics=("parallel",),   # megacore on v7x
            vmem_limit_bytes=32 * 1024 * 1024,
        ),
        cost_estimate=pl.CostEstimate(flops=flops,
                                      transcendentals=transcendentals,
                                      bytes_accessed=bytes_accessed),
    )(x2, ids2, adj_bd, gmask, emb_tab, wqkv, bqkv, masks, wg, bg)

    return out2.reshape(b, n, c_out)


def _reference_forward(x, edge_index, joint_ids, params, heads):
    """Pure-JAX f32 reference mirroring the PyTorch module (single graph)."""
    c_out = params["wq"].shape[1]
    d = c_out // heads
    scale = float(d ** 0.5)
    xe = x + jnp.take(params["joint_embed"], joint_ids, axis=0)
    q = (xe @ params["wq"] + params["bq"]).reshape(-1, heads, d)
    k = (xe @ params["wk"] + params["bk"]).reshape(-1, heads, d)
    v = (xe @ params["wv"] + params["bv"]).reshape(-1, heads, d)
    scores = jnp.einsum("nhd,mhd->hnm", q, k) / scale
    attn = jax.nn.softmax(scores, axis=-1)
    out = jnp.einsum("hnm,mhd->nhd", attn, v).reshape(x.shape[0], -1)
    adj = _gcn_norm_dense(edge_index, x.shape[0])
    return adj @ (out @ params["wg"]) + params["bg"]


def init_params(key, in_channels, out_channels, num_joints):
    ks = jax.random.split(key, 6)
    s_lin = 1.0 / np.sqrt(in_channels)
    s_gcn = 1.0 / np.sqrt(out_channels)
    return {
        "wq": jax.random.uniform(ks[0], (in_channels, out_channels), jnp.float32, -s_lin, s_lin),
        "bq": jax.random.uniform(ks[1], (1, out_channels), jnp.float32, -s_lin, s_lin),
        "wk": jax.random.uniform(ks[2], (in_channels, out_channels), jnp.float32, -s_lin, s_lin),
        "bk": jax.random.uniform(ks[3], (1, out_channels), jnp.float32, -s_lin, s_lin),
        "wv": jax.random.uniform(ks[4], (in_channels, out_channels), jnp.float32, -s_lin, s_lin),
        "bv": jax.random.uniform(ks[5], (1, out_channels), jnp.float32, -s_lin, s_lin),
        "joint_embed": jax.random.normal(jax.random.fold_in(key, 100),
                                         (num_joints, out_channels), jnp.float32),
        "wg": jax.random.uniform(jax.random.fold_in(key, 101),
                                 (out_channels, out_channels), jnp.float32, -s_gcn, s_gcn),
        "bg": jnp.zeros((1, out_channels), jnp.float32),
    }


if __name__ == "__main__":
    # NOTE: `x + joint_embed(joint_ids)` requires in_channels == out_channels.
    # C = 128 keeps every kernel block lane-dense (last dim multiple of 128).
    B, N, C_IN, C_OUT, HEADS, NUM_JOINTS, E = 8, 16, 128, 128, 4, 16, 48

    key = jax.random.PRNGKey(0)
    kx, ke, kj, kp = jax.random.split(key, 4)

    x = jax.random.normal(kx, (B, N, C_IN), jnp.float32)
    edge_index = jax.random.randint(ke, (B, 2, E), 0, N, dtype=jnp.int32)
    joint_ids = jax.random.randint(kj, (B, N), 0, NUM_JOINTS, dtype=jnp.int32)
    params = init_params(kp, C_IN, C_OUT, NUM_JOINTS)

    out = graph_attention_forward(x, edge_index, joint_ids, params, HEADS)
    out = jax.block_until_ready(out)

    ref = jax.vmap(_reference_forward, in_axes=(0, 0, 0, None, None))(
        x, edge_index, joint_ids, params, HEADS)
    # Tolerance covers bf16 MXU operands (f32 accumulation) and the EUP
    # approximate reciprocal in the softmax denominator.
    np.testing.assert_allclose(np.asarray(out), np.asarray(ref),
                               rtol=5e-2, atol=5e-2)

    print("KERNEL_OK")
</pallas_src>

<mosaic_0001>
module attributes {stable_mosaic.version = 11 : i64} {
  func.func @_gat_kernel(%arg0: i32, %arg1: memref<64x128xbf16, #tpu.memory_space<vmem>>, %arg2: memref<64x1xi32, #tpu.memory_space<vmem>>, %arg3: memref<64x64xbf16, #tpu.memory_space<vmem>>, %arg4: memref<64x64xf32, #tpu.memory_space<vmem>>, %arg5: memref<16x128xbf16, #tpu.memory_space<vmem>>, %arg6: memref<128x384xbf16, #tpu.memory_space<vmem>>, %arg7: memref<1x384xf32, #tpu.memory_space<vmem>>, %arg8: memref<4x1x128xbf16, #tpu.memory_space<vmem>>, %arg9: memref<128x128xbf16, #tpu.memory_space<vmem>>, %arg10: memref<1x128xf32, #tpu.memory_space<vmem>>, %arg11: memref<64x128xf32, #tpu.memory_space<vmem>>) attributes {dimension_semantics = [#tpu.dimension_semantics<parallel>], iteration_bounds = array<i64: 2>, scalar_prefetch = 0 : i64, scratch_operands = 0 : i64, tpu.core_type = #tpu.core_type<tc>, window_params = [{transform_indices = @transform_0, window_bounds = array<i64: 64, 128>}, {transform_indices = @transform_1, window_bounds = array<i64: 64, 1>}, {transform_indices = @transform_2, window_bounds = array<i64: 64, 64>}, {pipeline_mode = #tpu.pipeline_mode<synchronous>, transform_indices = @transform_3, window_bounds = array<i64: 64, 64>}, {pipeline_mode = #tpu.pipeline_mode<synchronous>, transform_indices = @transform_4, window_bounds = array<i64: 16, 128>}, {pipeline_mode = #tpu.pipeline_mode<synchronous>, transform_indices = @transform_5, window_bounds = array<i64: 128, 384>}, {pipeline_mode = #tpu.pipeline_mode<synchronous>, transform_indices = @transform_6, window_bounds = array<i64: 1, 384>}, {pipeline_mode = #tpu.pipeline_mode<synchronous>, transform_indices = @transform_7, window_bounds = array<i64: 4, 1, 128>}, {pipeline_mode = #tpu.pipeline_mode<synchronous>, transform_indices = @transform_8, window_bounds = array<i64: 128, 128>}, {pipeline_mode = #tpu.pipeline_mode<synchronous>, transform_indices = @transform_9, window_bounds = array<i64: 1, 128>}, {transform_indices = @transform_10, window_bounds = array<i64: 64, 128>}]} {
    %0 = tpu.iota {dimensions = array<i32: 1>} : vector<64x16xi32>
    %c0 = arith.constant 0 : index
    %c0_0 = arith.constant 0 : index
    %1 = vector.load %arg2[%c0, %c0_0] : memref<64x1xi32, #tpu.memory_space<vmem>>, vector<64x1xi32>
    %2 = vector.broadcast %1 : vector<64x1xi32> to vector<64x16xi32>
    %3 = arith.cmpi eq, %2, %0 : vector<64x16xi32>
    %4 = arith.extui %3 : vector<64x16xi1> to vector<64x16xi32>
    %5 = arith.sitofp %4 : vector<64x16xi32> to vector<64x16xf32>
    %6 = arith.truncf %5 : vector<64x16xf32> to vector<64x16xbf16>
    %c0_1 = arith.constant 0 : index
    %c0_2 = arith.constant 0 : index
    %7 = vector.load %arg5[%c0_1, %c0_2] : memref<16x128xbf16, #tpu.memory_space<vmem>>, vector<16x128xbf16>
    %cst = arith.constant dense<0.000000e+00> : vector<64x128xf32>
    %8 = tpu.matmul %6, %7, %cst {dimension_numbers = #tpu.dot_dimension_numbers<[1], [0], [0], [1], [0, 0, 1, 1], [], []>} : vector<64x16xbf16>, vector<16x128xbf16>, vector<64x128xf32> -> vector<64x128xf32>
    %c0_3 = arith.constant 0 : index
    %c0_4 = arith.constant 0 : index
    %9 = vector.load %arg1[%c0_3, %c0_4] : memref<64x128xbf16, #tpu.memory_space<vmem>>, vector<64x128xbf16>
    %10 = arith.extf %9 : vector<64x128xbf16> to vector<64x128xf32>
    %11 = arith.addf %10, %8 : vector<64x128xf32>
    %12 = arith.truncf %11 : vector<64x128xf32> to vector<64x128xbf16>
    %c0_5 = arith.constant 0 : index
    %c0_6 = arith.constant 0 : index
    %13 = vector.load %arg6[%c0_5, %c0_6] : memref<128x384xbf16, #tpu.memory_space<vmem>>, vector<128x384xbf16>
    %cst_7 = arith.constant dense<0.000000e+00> : vector<64x384xf32>
    %14 = tpu.matmul %12, %13, %cst_7 {dimension_numbers = #tpu.dot_dimension_numbers<[1], [0], [0], [1], [0, 0, 1, 1], [], []>} : vector<64x128xbf16>, vector<128x384xbf16>, vector<64x384xf32> -> vector<64x384xf32>
    %c0_8 = arith.constant 0 : index
    %c0_9 = arith.constant 0 : index
    %15 = vector.load %arg7[%c0_8, %c0_9] : memref<1x384xf32, #tpu.memory_space<vmem>>, vector<1x384xf32>
    %16 = vector.broadcast %15 : vector<1x384xf32> to vector<64x384xf32>
    %17 = arith.addf %14, %16 : vector<64x384xf32>
    %18 = vector.extract_strided_slice %17 {offsets = [0, 0], sizes = [64, 128], strides = [1, 1]} : vector<64x384xf32> to vector<64x128xf32>
    %19 = arith.truncf %18 : vector<64x128xf32> to vector<64x128xbf16>
    %20 = vector.extract_strided_slice %17 {offsets = [0, 128], sizes = [64, 128], strides = [1, 1]} : vector<64x384xf32> to vector<64x128xf32>
    %21 = arith.truncf %20 : vector<64x128xf32> to vector<64x128xbf16>
    %22 = vector.extract_strided_slice %17 {offsets = [0, 256], sizes = [64, 128], strides = [1, 1]} : vector<64x384xf32> to vector<64x128xf32>
    %23 = arith.truncf %22 : vector<64x128xf32> to vector<64x128xbf16>
    %c0_10 = arith.constant 0 : index
    %c0_11 = arith.constant 0 : index
    %24 = vector.load %arg4[%c0_10, %c0_11] : memref<64x64xf32, #tpu.memory_space<vmem>>, vector<64x64xf32>
    %c0_12 = arith.constant 0 : index
    %c0_13 = arith.constant 0 : index
    %c0_14 = arith.constant 0 : index
    %25 = vector.load %arg8[%c0_12, %c0_13, %c0_14] : memref<4x1x128xbf16, #tpu.memory_space<vmem>>, vector<1x1x128xbf16>
    %26 = vector.shape_cast %25 : vector<1x1x128xbf16> to vector<1x128xbf16>
    %27 = vector.broadcast %26 : vector<1x128xbf16> to vector<64x128xbf16>
    %28 = arith.mulf %19, %27 : vector<64x128xbf16>
    %cst_15 = arith.constant dense<0.000000e+00> : vector<64x64xf32>
    %29 = tpu.matmul %28, %21, %cst_15 {dimension_numbers = #tpu.dot_dimension_numbers<[1], [1], [0], [0], [0, 0, 1, 0], [], []>} : vector<64x128xbf16>, vector<64x128xbf16>, vector<64x64xf32> -> vector<64x64xf32>
    %30 = arith.addf %29, %24 : vector<64x64xf32>
    %cst_16 = arith.constant dense<0xFF800000> : vector<64xf32>
    %31 = vector.multi_reduction <maximumf>, %30, %cst_16 [1] : vector<64x64xf32> to vector<64xf32>
    %32 = vector.shape_cast %31 : vector<64xf32> to vector<64x1xf32>
    %33 = vector.broadcast %32 : vector<64x1xf32> to vector<64x64xf32>
    %34 = arith.subf %30, %33 : vector<64x64xf32>
    %35 = math.exp %34 : vector<64x64xf32>
    %cst_17 = arith.constant dense<0.000000e+00> : vector<64xf32>
    %36 = vector.multi_reduction <add>, %35, %cst_17 [1] : vector<64x64xf32> to vector<64xf32>
    %37 = vector.shape_cast %36 : vector<64xf32> to vector<64x1xf32>
    %38 = tpu.reciprocal %37 {approx = true} : vector<64x1xf32> -> vector<64x1xf32>
    %39 = vector.broadcast %38 : vector<64x1xf32> to vector<64x64xf32>
    %40 = arith.mulf %35, %39 : vector<64x64xf32>
    %41 = arith.truncf %40 : vector<64x64xf32> to vector<64x64xbf16>
    %42 = vector.broadcast %26 : vector<1x128xbf16> to vector<64x128xbf16>
    %43 = arith.mulf %23, %42 : vector<64x128xbf16>
    %cst_18 = arith.constant dense<0.000000e+00> : vector<64x128xf32>
    %44 = tpu.matmul %41, %43, %cst_18 {dimension_numbers = #tpu.dot_dimension_numbers<[1], [0], [0], [1], [0, 0, 1, 1], [], []>} : vector<64x64xbf16>, vector<64x128xbf16>, vector<64x128xf32> -> vector<64x128xf32>
    %c1 = arith.constant 1 : index
    %c0_19 = arith.constant 0 : index
    %c0_20 = arith.constant 0 : index
    %45 = vector.load %arg8[%c1, %c0_19, %c0_20] : memref<4x1x128xbf16, #tpu.memory_space<vmem>>, vector<1x1x128xbf16>
    %46 = vector.shape_cast %45 : vector<1x1x128xbf16> to vector<1x128xbf16>
    %47 = vector.broadcast %46 : vector<1x128xbf16> to vector<64x128xbf16>
    %48 = arith.mulf %19, %47 : vector<64x128xbf16>
    %cst_21 = arith.constant dense<0.000000e+00> : vector<64x64xf32>
    %49 = tpu.matmul %48, %21, %cst_21 {dimension_numbers = #tpu.dot_dimension_numbers<[1], [1], [0], [0], [0, 0, 1, 0], [], []>} : vector<64x128xbf16>, vector<64x128xbf16>, vector<64x64xf32> -> vector<64x64xf32>
    %50 = arith.addf %49, %24 : vector<64x64xf32>
    %cst_22 = arith.constant dense<0xFF800000> : vector<64xf32>
    %51 = vector.multi_reduction <maximumf>, %50, %cst_22 [1] : vector<64x64xf32> to vector<64xf32>
    %52 = vector.shape_cast %51 : vector<64xf32> to vector<64x1xf32>
    %53 = vector.broadcast %52 : vector<64x1xf32> to vector<64x64xf32>
    %54 = arith.subf %50, %53 : vector<64x64xf32>
    %55 = math.exp %54 : vector<64x64xf32>
    %cst_23 = arith.constant dense<0.000000e+00> : vector<64xf32>
    %56 = vector.multi_reduction <add>, %55, %cst_23 [1] : vector<64x64xf32> to vector<64xf32>
    %57 = vector.shape_cast %56 : vector<64xf32> to vector<64x1xf32>
    %58 = tpu.reciprocal %57 {approx = true} : vector<64x1xf32> -> vector<64x1xf32>
    %59 = vector.broadcast %58 : vector<64x1xf32> to vector<64x64xf32>
    %60 = arith.mulf %55, %59 : vector<64x64xf32>
    %61 = arith.truncf %60 : vector<64x64xf32> to vector<64x64xbf16>
    %62 = vector.broadcast %46 : vector<1x128xbf16> to vector<64x128xbf16>
    %63 = arith.mulf %23, %62 : vector<64x128xbf16>
    %cst_24 = arith.constant dense<0.000000e+00> : vector<64x128xf32>
    %64 = tpu.matmul %61, %63, %cst_24 {dimension_numbers = #tpu.dot_dimension_numbers<[1], [0], [0], [1], [0, 0, 1, 1], [], []>} : vector<64x64xbf16>, vector<64x128xbf16>, vector<64x128xf32> -> vector<64x128xf32>
    %65 = arith.addf %44, %64 : vector<64x128xf32>
    %c2 = arith.constant 2 : index
    %c0_25 = arith.constant 0 : index
    %c0_26 = arith.constant 0 : index
    %66 = vector.load %arg8[%c2, %c0_25, %c0_26] : memref<4x1x128xbf16, #tpu.memory_space<vmem>>, vector<1x1x128xbf16>
    %67 = vector.shape_cast %66 : vector<1x1x128xbf16> to vector<1x128xbf16>
    %68 = vector.broadcast %67 : vector<1x128xbf16> to vector<64x128xbf16>
    %69 = arith.mulf %19, %68 : vector<64x128xbf16>
    %cst_27 = arith.constant dense<0.000000e+00> : vector<64x64xf32>
    %70 = tpu.matmul %69, %21, %cst_27 {dimension_numbers = #tpu.dot_dimension_numbers<[1], [1], [0], [0], [0, 0, 1, 0], [], []>} : vector<64x128xbf16>, vector<64x128xbf16>, vector<64x64xf32> -> vector<64x64xf32>
    %71 = arith.addf %70, %24 : vector<64x64xf32>
    %cst_28 = arith.constant dense<0xFF800000> : vector<64xf32>
    %72 = vector.multi_reduction <maximumf>, %71, %cst_28 [1] : vector<64x64xf32> to vector<64xf32>
    %73 = vector.shape_cast %72 : vector<64xf32> to vector<64x1xf32>
    %74 = vector.broadcast %73 : vector<64x1xf32> to vector<64x64xf32>
    %75 = arith.subf %71, %74 : vector<64x64xf32>
    %76 = math.exp %75 : vector<64x64xf32>
    %cst_29 = arith.constant dense<0.000000e+00> : vector<64xf32>
    %77 = vector.multi_reduction <add>, %76, %cst_29 [1] : vector<64x64xf32> to vector<64xf32>
    %78 = vector.shape_cast %77 : vector<64xf32> to vector<64x1xf32>
    %79 = tpu.reciprocal %78 {approx = true} : vector<64x1xf32> -> vector<64x1xf32>
    %80 = vector.broadcast %79 : vector<64x1xf32> to vector<64x64xf32>
    %81 = arith.mulf %76, %80 : vector<64x64xf32>
    %82 = arith.truncf %81 : vector<64x64xf32> to vector<64x64xbf16>
    %83 = vector.broadcast %67 : vector<1x128xbf16> to vector<64x128xbf16>
    %84 = arith.mulf %23, %83 : vector<64x128xbf16>
    %cst_30 = arith.constant dense<0.000000e+00> : vector<64x128xf32>
    %85 = tpu.matmul %82, %84, %cst_30 {dimension_numbers = #tpu.dot_dimension_numbers<[1], [0], [0], [1], [0, 0, 1, 1], [], []>} : vector<64x64xbf16>, vector<64x128xbf16>, vector<64x128xf32> -> vector<64x128xf32>
    %86 = arith.addf %65, %85 : vector<64x128xf32>
    %c3 = arith.constant 3 : index
    %c0_31 = arith.constant 0 : index
    %c0_32 = arith.constant 0 : index
    %87 = vector.load %arg8[%c3, %c0_31, %c0_32] : memref<4x1x128xbf16, #tpu.memory_space<vmem>>, vector<1x1x128xbf16>
    %88 = vector.shape_cast %87 : vector<1x1x128xbf16> to vector<1x128xbf16>
    %89 = vector.broadcast %88 : vector<1x128xbf16> to vector<64x128xbf16>
    %90 = arith.mulf %19, %89 : vector<64x128xbf16>
    %cst_33 = arith.constant dense<0.000000e+00> : vector<64x64xf32>
    %91 = tpu.matmul %90, %21, %cst_33 {dimension_numbers = #tpu.dot_dimension_numbers<[1], [1], [0], [0], [0, 0, 1, 0], [], []>} : vector<64x128xbf16>, vector<64x128xbf16>, vector<64x64xf32> -> vector<64x64xf32>
    %92 = arith.addf %91, %24 : vector<64x64xf32>
    %cst_34 = arith.constant dense<0xFF800000> : vector<64xf32>
    %93 = vector.multi_reduction <maximumf>, %92, %cst_34 [1] : vector<64x64xf32> to vector<64xf32>
    %94 = vector.shape_cast %93 : vector<64xf32> to vector<64x1xf32>
    %95 = vector.broadcast %94 : vector<64x1xf32> to vector<64x64xf32>
    %96 = arith.subf %92, %95 : vector<64x64xf32>
    %97 = math.exp %96 : vector<64x64xf32>
    %cst_35 = arith.constant dense<0.000000e+00> : vector<64xf32>
    %98 = vector.multi_reduction <add>, %97, %cst_35 [1] : vector<64x64xf32> to vector<64xf32>
    %99 = vector.shape_cast %98 : vector<64xf32> to vector<64x1xf32>
    %100 = tpu.reciprocal %99 {approx = true} : vector<64x1xf32> -> vector<64x1xf32>
    %101 = vector.broadcast %100 : vector<64x1xf32> to vector<64x64xf32>
    %102 = arith.mulf %97, %101 : vector<64x64xf32>
    %103 = arith.truncf %102 : vector<64x64xf32> to vector<64x64xbf16>
    %104 = vector.broadcast %88 : vector<1x128xbf16> to vector<64x128xbf16>
    %105 = arith.mulf %23, %104 : vector<64x128xbf16>
    %cst_36 = arith.constant dense<0.000000e+00> : vector<64x128xf32>
    %106 = tpu.matmul %103, %105, %cst_36 {dimension_numbers = #tpu.dot_dimension_numbers<[1], [0], [0], [1], [0, 0, 1, 1], [], []>} : vector<64x64xbf16>, vector<64x128xbf16>, vector<64x128xf32> -> vector<64x128xf32>
    %107 = arith.addf %86, %106 : vector<64x128xf32>
    %108 = arith.truncf %107 : vector<64x128xf32> to vector<64x128xbf16>
    %c0_37 = arith.constant 0 : index
    %c0_38 = arith.constant 0 : index
    %109 = vector.load %arg9[%c0_37, %c0_38] : memref<128x128xbf16, #tpu.memory_space<vmem>>, vector<128x128xbf16>
    %cst_39 = arith.constant dense<0.000000e+00> : vector<64x128xf32>
    %110 = tpu.matmul %108, %109, %cst_39 {dimension_numbers = #tpu.dot_dimension_numbers<[1], [0], [0], [1], [0, 0, 1, 1], [], []>} : vector<64x128xbf16>, vector<128x128xbf16>, vector<64x128xf32> -> vector<64x128xf32>
    %c0_40 = arith.constant 0 : index
    %c0_41 = arith.constant 0 : index
    %111 = vector.load %arg3[%c0_40, %c0_41] : memref<64x64xbf16, #tpu.memory_space<vmem>>, vector<64x64xbf16>
    %112 = arith.truncf %110 : vector<64x128xf32> to vector<64x128xbf16>
    %cst_42 = arith.constant dense<0.000000e+00> : vector<64x128xf32>
    %113 = tpu.matmul %111, %112, %cst_42 {dimension_numbers = #tpu.dot_dimension_numbers<[1], [0], [0], [1], [0, 0, 1, 1], [], []>} : vector<64x64xbf16>, vector<64x128xbf16>, vector<64x128xf32> -> vector<64x128xf32>
    %c0_43 = arith.constant 0 : index
    %c0_44 = arith.constant 0 : index
    %114 = vector.load %arg10[%c0_43, %c0_44] : memref<1x128xf32, #tpu.memory_space<vmem>>, vector<1x128xf32>
    %115 = vector.broadcast %114 : vector<1x128xf32> to vector<64x128xf32>
    %116 = arith.addf %113, %115 : vector<64x128xf32>
    %c0_45 = arith.constant 0 : index
    %c0_46 = arith.constant 0 : index
    %117 = vector.load %arg11[%c0_45, %c0_46] : memref<64x128xf32, #tpu.memory_space<vmem>>, vector<64x128xf32>
    tpu.vector_store %arg11[%c0_45, %c0_46], %116 {strides = array<i32>} : memref<64x128xf32, #tpu.memory_space<vmem>>, vector<64x128xf32>,
    return
  }
  func.func @transform_0(%arg0: i32) -> (i32, i32) {
    %c0_i32 = arith.constant 0 : i32
    %c0_i32_0 = arith.constant 0 : i32
    return %arg0, %c0_i32 : i32, i32
  }
  func.func @transform_1(%arg0: i32) -> (i32, i32) {
    %c0_i32 = arith.constant 0 : i32
    %c0_i32_0 = arith.constant 0 : i32
    return %arg0, %c0_i32 : i32, i32
  }
  func.func @transform_2(%arg0: i32) -> (i32, i32) {
    %c0_i32 = arith.constant 0 : i32
    %c0_i32_0 = arith.constant 0 : i32
    return %arg0, %c0_i32 : i32, i32
  }
  func.func @transform_3(%arg0: i32) -> (i32, i32) {
    %c0_i32 = arith.constant 0 : i32
    %c0_i32_0 = arith.constant 0 : i32
    %c0_i32_1 = arith.constant 0 : i32
    return %c0_i32, %c0_i32_0 : i32, i32
  }
  func.func @transform_4(%arg0: i32) -> (i32, i32) {
    %c0_i32 = arith.constant 0 : i32
    %c0_i32_0 = arith.constant 0 : i32
    %c0_i32_1 = arith.constant 0 : i32
    return %c0_i32, %c0_i32_0 : i32, i32
  }
  func.func @transform_5(%arg0: i32) -> (i32, i32) {
    %c0_i32 = arith.constant 0 : i32
    %c0_i32_0 = arith.constant 0 : i32
    %c0_i32_1 = arith.constant 0 : i32
    return %c0_i32, %c0_i32_0 : i32, i32
  }
  func.func @transform_6(%arg0: i32) -> (i32, i32) {
    %c0_i32 = arith.constant 0 : i32
    %c0_i32_0 = arith.constant 0 : i32
    %c0_i32_1 = arith.constant 0 : i32
    return %c0_i32, %c0_i32_0 : i32, i32
  }
  func.func @transform_7(%arg0: i32) -> (i32, i32, i32) {
    %c0_i32 = arith.constant 0 : i32
    %c0_i32_0 = arith.constant 0 : i32
    %c0_i32_1 = arith.constant 0 : i32
    %c0_i32_2 = arith.constant 0 : i32
    return %c0_i32, %c0_i32_0, %c0_i32_1 : i32, i32, i32
  }
  func.func @transform_8(%arg0: i32) -> (i32, i32) {
    %c0_i32 = arith.constant 0 : i32
    %c0_i32_0 = arith.constant 0 : i32
    %c0_i32_1 = arith.constant 0 : i32
    return %c0_i32, %c0_i32_0 : i32, i32
  }
  func.func @transform_9(%arg0: i32) -> (i32, i32) {
    %c0_i32 = arith.constant 0 : i32
    %c0_i32_0 = arith.constant 0 : i32
    %c0_i32_1 = arith.constant 0 : i32
    return %c0_i32, %c0_i32_0 : i32, i32
  }
  func.func @transform_10(%arg0: i32) -> (i32, i32) {
    %c0_i32 = arith.constant 0 : i32
    %c0_i32_0 = arith.constant 0 : i32
    return %arg0, %c0_i32 : i32, i32
  }
}

</mosaic_0001>

<llo_original>
// kernel: tpu_custom_call.1
$region0: #{tpu_custom_call.1}
  #allocation0 [shape = 'u32[]', space=smem, size = 0x4, offset = 0x4, fixed_abs, tag = 'smem constant byte address 0x4 - core index']
  #allocation1 [shape = 'u32[72,128]{1,0:T(1,128)}', space=vmem, size = 0x9000, scoped, tag = 'internal scratch']
  %s0 = inlined_call_operand.hbm [shape: bf16[128,128], index: 0, kind: input, shape index: {}]
  %s1 = inlined_call_operand.vmem [shape: s32[128,1], index: 1, kind: input, shape index: {}]
  %s2 = inlined_call_operand.vmem [shape: bf16[128,64], index: 2, kind: input, shape index: {}]
  %s3 = inlined_call_operand.hbm [shape: f32[64,64], index: 3, kind: input, shape index: {}]
  %s4 = inlined_call_operand.vmem [shape: bf16[16,128], index: 4, kind: input, shape index: {}]
  %s5 = inlined_call_operand.vmem [shape: bf16[128,384], index: 5, kind: input, shape index: {}]
  %s6 = inlined_call_operand.vmem [shape: f32[1,384], index: 6, kind: input, shape index: {}]
  %s7 = inlined_call_operand.vmem [shape: bf16[4,1,128], index: 7, kind: input, shape index: {}]
  %s8 = inlined_call_operand.hbm [shape: bf16[128,128], index: 8, kind: input, shape index: {}]
  %s9 = inlined_call_operand.vmem [shape: f32[1,128], index: 9, kind: input, shape index: {}]
  %s10 = inlined_call_operand.hbm [shape: f32[128,128], index: 10, kind: output, shape index: {}]
  %s11 = sld [smem:[#allocation0]]
  $region85: #{tpu_custom_call.1} parent=0
    _
  %s13 = ssub.s32 1, %s11
  %s14 = scalar_select 0, %s13, %s11
  $region1: #{tpu_custom_call.1} parent=0
    #allocation2 [shape = 'u8[32768]{0}', space=vmem, size = 0x8000, scoped, tag = 'input window, operand 0']
    #allocation3 [shape = 's32[2]{0}', space=sflag, size = 0x8, scoped, tag = 'scoped memory for tpu_custom_call.1']
    #allocation4 [shape = 's32[2]{0}', space=sflag, size = 0x8, scoped, tag = 'scoped memory for tpu_custom_call.1']
    #allocation5 [shape = 'u8[32768]{0}', space=vmem, size = 0x8000, scoped, tag = 'input window, operand 3, single buffered']
    #allocation6 [shape = 's32[1]{0}', space=sflag, size = 0x4, scoped, tag = 'scoped memory for tpu_custom_call.1']
    #allocation7 [shape = 'u8[32768]{0}', space=vmem, size = 0x8000, scoped, tag = 'input window, operand 8, single buffered']
    #allocation8 [shape = 'u8[65536]{0}', space=vmem, size = 0x10000, scoped, tag = 'output window, operand 0']
    %15 = vsyncpa [#allocation3], 0
    %s16 = scalar_lea.sflag [#allocation3], 1
    %17 = vsyncpa %s16, 0
    %18 = vsyncpa [#allocation6], 0
    %19 = vsyncpa [#allocation4], 0
    %s20 = scalar_lea.sflag [#allocation4], 1
    %21 = vsyncpa %s20, 0
    loop: start=0, step=1, limit=4
    $region2: #{tpu_custom_call.1} parent=1 // loop_pre_header
      _
    $region3: #{tpu_custom_call.1} parent=1 // loop_header
      %s23 = sphi 0, %s27
      %p24 = scmp.ge.s32.totalorder %s23, 4
      %s33 = sphi 0, %s35
      %s36 = sphi 0, %s33
      %s37 = sphi 0, %s36
      %s53 = sphi 0, %s37
      %s59 = sphi 0, %s61
      %s62 = sphi 0, %s59
      %s63 = sphi 0, %s62
      %s79 = sphi 0, %s63
      %s85 = sphi 0, %s87
      %s88 = sphi 0, %s85
      %s89 = sphi 0, %s88
      %s105 = sphi 0, %s89
      %s109 = sphi 0, %s109
      %s111 = sphi 0, %s109
      %s112 = sphi 0, %s111
      %s126 = sphi 0, %s112
      %s130 = sphi 0, %s130
      %s132 = sphi 0, %s130
      %s133 = sphi 0, %s132
      %s147 = sphi 0, %s133
      %s151 = sphi 0, %s151
      %s153 = sphi 0, %s151
      %s154 = sphi 0, %s153
      %s168 = sphi 0, %s154
      %s172 = sphi 0, %s172
      %s174 = sphi 0, %s172
      %s175 = sphi 0, %s174
      %s189 = sphi 0, %s175
      %s193 = sphi 0, %s193
      %s195 = sphi 0, %s193
      %s196 = sphi 0, %s195
      %s210 = sphi 0, %s196
      %s214 = sphi 0, %s214
      %s216 = sphi 0, %s214
      %s217 = sphi 0, %s216
      %s231 = sphi 0, %s217
      %s235 = sphi 0, %s235
      %s237 = sphi 0, %s235
      %s238 = sphi 0, %s237
      %s252 = sphi 0, %s238
      %s258 = sphi 0, %s260
      %s261 = sphi 0, %s258
      %s262 = sphi 0, %s261
      %s278 = sphi 0, %s262
    $region4: #{tpu_custom_call.1} parent=1 // loop_header_branch
      %26 = sbr.rel (%p24) target = $region8
    $region5: #{tpu_custom_call.1} parent=1 // loop_body
      %s28 = ssub.s32 %s23, 1
      %s29 = ssub.s32 %s23, 2
      %s30 = sadd.s32 %s23, 1
      %s31 = ssub.s32 %s23, %s30
      %p32 = scmp.eq.s32.totalorder %s31, 0
      %s34 = sadd.s32 %s33, 1
      %s35 = scalar_select %p32, %s33, %s34
      %p38 = pneg %p32
      %p39 = scmp.eq.s32.totalorder %s23, 1
      %p40 = por %p38, %p39
      %p41 = scmp.ne.s32.totalorder %s33, %s36
      %p42 = scmp.eq.s32.totalorder %s23, 0
      %p43 = por %p41, %p42
      %p44 = scmp.ne.s32.totalorder %s33, %s36
      %p45 = scmp.eq.s32.totalorder %s28, 1
      %p46 = por %p44, %p45
      %p47 = scmp.ne.s32.totalorder %s36, %s37
      %p48 = scmp.eq.s32.totalorder %s28, 0
      %p49 = por %p47, %p48
      %p50 = scmp.ne.s32.totalorder %s36, %s37
      %p51 = scmp.eq.s32.totalorder %s29, 1
      %p52 = por %p50, %p51
      %p54 = scmp.ne.s32.totalorder %s37, %s53
      %p55 = scmp.eq.s32.totalorder %s29, 0
      %p56 = por %p54, %p55
      %s57 = ssub.s32 %s23, %s30
      %p58 = scmp.eq.s32.totalorder %s57, 0
      %s60 = sadd.s32 %s59, 1
      %s61 = scalar_select %p58, %s59, %s60
      %p64 = pneg %p58
      %p65 = scmp.eq.s32.totalorder %s23, 1
      %p66 = por %p64, %p65
      %p67 = scmp.ne.s32.totalorder %s59, %s62
      %p68 = scmp.eq.s32.totalorder %s23, 0
      %p69 = por %p67, %p68
      %p70 = scmp.ne.s32.totalorder %s59, %s62
      %p71 = scmp.eq.s32.totalorder %s28, 1
      %p72 = por %p70, %p71
      %p73 = scmp.ne.s32.totalorder %s62, %s63
      %p74 = scmp.eq.s32.totalorder %s28, 0
      %p75 = por %p73, %p74
      %p76 = scmp.ne.s32.totalorder %s62, %s63
      %p77 = scmp.eq.s32.totalorder %s29, 1
      %p78 = por %p76, %p77
      %p80 = scmp.ne.s32.totalorder %s63, %s79
      %p81 = scmp.eq.s32.totalorder %s29, 0
      %p82 = por %p80, %p81
      %s83 = ssub.s32 %s23, %s30
      %p84 = scmp.eq.s32.totalorder %s83, 0
      %s86 = sadd.s32 %s85, 1
      %s87 = scalar_select %p84, %s85, %s86
      %p90 = pneg %p84
      %p91 = scmp.eq.s32.totalorder %s23, 1
      %p92 = por %p90, %p91
      %p93 = scmp.ne.s32.totalorder %s85, %s88
      %p94 = scmp.eq.s32.totalorder %s23, 0
      %p95 = por %p93, %p94
      %p96 = scmp.ne.s32.totalorder %s85, %s88
      %p97 = scmp.eq.s32.totalorder %s28, 1
      %p98 = por %p96, %p97
      %p99 = scmp.ne.s32.totalorder %s88, %s89
      %p100 = scmp.eq.s32.totalorder %s28, 0
      %p101 = por %p99, %p100
      %p102 = scmp.ne.s32.totalorder %s88, %s89
      %p103 = scmp.eq.s32.totalorder %s29, 1
      %p104 = por %p102, %p103
      %p106 = scmp.ne.s32.totalorder %s89, %s105
      %p107 = scmp.eq.s32.totalorder %s29, 0
      %p108 = por %p106, %p107
      %s110 = sadd.s32 %s109, 1
      %p113 = scmp.eq.s32.totalorder %s23, 1
      %p114 = scmp.ne.s32.totalorder %s109, %s111
      %p115 = scmp.eq.s32.totalorder %s23, 0
      %p116 = por %p114, %p115
      %p117 = scmp.ne.s32.totalorder %s109, %s111
      %p118 = scmp.eq.s32.totalorder %s28, 1
      %p119 = por %p117, %p118
      %p120 = scmp.ne.s32.totalorder %s111, %s112
      %p121 = scmp.eq.s32.totalorder %s28, 0
      %p122 = por %p120, %p121
      %p123 = scmp.ne.s32.totalorder %s111, %s112
      %p124 = scmp.eq.s32.totalorder %s29, 1
      %p125 = por %p123, %p124
      %p127 = scmp.ne.s32.totalorder %s112, %s126
      %p128 = scmp.eq.s32.totalorder %s29, 0
      %p129 = por %p127, %p128
      %s131 = sadd.s32 %s130, 1
      %p134 = scmp.eq.s32.totalorder %s23, 1
      %p135 = scmp.ne.s32.totalorder %s130, %s132
      %p136 = scmp.eq.s32.totalorder %s23, 0
      %p137 = por %p135, %p136
      %p138 = scmp.ne.s32.totalorder %s130, %s132
      %p139 = scmp.eq.s32.totalorder %s28, 1
      %p140 = por %p138, %p139
      %p141 = scmp.ne.s32.totalorder %s132, %s133
      %p142 = scmp.eq.s32.totalorder %s28, 0
      %p143 = por %p141, %p142
      %p144 = scmp.ne.s32.totalorder %s132, %s133
      %p145 = scmp.eq.s32.totalorder %s29, 1
      %p146 = por %p144, %p145
      %p148 = scmp.ne.s32.totalorder %s133, %s147
      %p149 = scmp.eq.s32.totalorder %s29, 0
      %p150 = por %p148, %p149
      %s152 = sadd.s32 %s151, 1
      %p155 = scmp.eq.s32.totalorder %s23, 1
      %p156 = scmp.ne.s32.totalorder %s151, %s153
      %p157 = scmp.eq.s32.totalorder %s23, 0
      %p158 = por %p156, %p157
      %p159 = scmp.ne.s32.totalorder %s151, %s153
      %p160 = scmp.eq.s32.totalorder %s28, 1
      %p161 = por %p159, %p160
      %p162 = scmp.ne.s32.totalorder %s153, %s154
      %p163 = scmp.eq.s32.totalorder %s28, 0
      %p164 = por %p162, %p163
      %p165 = scmp.ne.s32.totalorder %s153, %s154
      %p166 = scmp.eq.s32.totalorder %s29, 1
      %p167 = por %p165, %p166
      %p169 = scmp.ne.s32.totalorder %s154, %s168
      %p170 = scmp.eq.s32.totalorder %s29, 0
      %p171 = por %p169, %p170
      %s173 = sadd.s32 %s172, 1
      %p176 = scmp.eq.s32.totalorder %s23, 1
      %p177 = scmp.ne.s32.totalorder %s172, %s174
      %p178 = scmp.eq.s32.totalorder %s23, 0
      %p179 = por %p177, %p178
      %p180 = scmp.ne.s32.totalorder %s172, %s174
      %p181 = scmp.eq.s32.totalorder %s28, 1
      %p182 = por %p180, %p181
      %p183 = scmp.ne.s32.totalorder %s174, %s175
      %p184 = scmp.eq.s32.totalorder %s28, 0
      %p185 = por %p183, %p184
      %p186 = scmp.ne.s32.totalorder %s174, %s175
      %p187 = scmp.eq.s32.totalorder %s29, 1
      %p188 = por %p186, %p187
      %p190 = scmp.ne.s32.totalorder %s175, %s189
      %p191 = scmp.eq.s32.totalorder %s29, 0
      %p192 = por %p190, %p191
      %s194 = sadd.s32 %s193, 1
      %p197 = scmp.eq.s32.totalorder %s23, 1
      %p198 = scmp.ne.s32.totalorder %s193, %s195
      %p199 = scmp.eq.s32.totalorder %s23, 0
      %p200 = por %p198, %p199
      %p201 = scmp.ne.s32.totalorder %s193, %s195
      %p202 = scmp.eq.s32.totalorder %s28, 1
      %p203 = por %p201, %p202
      %p204 = scmp.ne.s32.totalorder %s195, %s196
      %p205 = scmp.eq.s32.totalorder %s28, 0
      %p206 = por %p204, %p205
      %p207 = scmp.ne.s32.totalorder %s195, %s196
      %p208 = scmp.eq.s32.totalorder %s29, 1
      %p209 = por %p207, %p208
      %p211 = scmp.ne.s32.totalorder %s196, %s210
      %p212 = scmp.eq.s32.totalorder %s29, 0
      %p213 = por %p211, %p212
      %s215 = sadd.s32 %s214, 1
      %p218 = scmp.eq.s32.totalorder %s23, 1
      %p219 = scmp.ne.s32.totalorder %s214, %s216
      %p220 = scmp.eq.s32.totalorder %s23, 0
      %p221 = por %p219, %p220
      %p222 = scmp.ne.s32.totalorder %s214, %s216
      %p223 = scmp.eq.s32.totalorder %s28, 1
      %p224 = por %p222, %p223
      %p225 = scmp.ne.s32.totalorder %s216, %s217
      %p226 = scmp.eq.s32.totalorder %s28, 0
      %p227 = por %p225, %p226
      %p228 = scmp.ne.s32.totalorder %s216, %s217
      %p229 = scmp.eq.s32.totalorder %s29, 1
      %p230 = por %p228, %p229
      %p232 = scmp.ne.s32.totalorder %s217, %s231
      %p233 = scmp.eq.s32.totalorder %s29, 0
      %p234 = por %p232, %p233
      %s236 = sadd.s32 %s235, 1
      %p239 = scmp.eq.s32.totalorder %s23, 1
      %p240 = scmp.ne.s32.totalorder %s235, %s237
      %p241 = scmp.eq.s32.totalorder %s23, 0
      %p242 = por %p240, %p241
      %p243 = scmp.ne.s32.totalorder %s235, %s237
      %p244 = scmp.eq.s32.totalorder %s28, 1
      %p245 = por %p243, %p244
      %p246 = scmp.ne.s32.totalorder %s237, %s238
      %p247 = scmp.eq.s32.totalorder %s28, 0
      %p248 = por %p246, %p247
      %p249 = scmp.ne.s32.totalorder %s237, %s238
      %p250 = scmp.eq.s32.totalorder %s29, 1
      %p251 = por %p249, %p250
      %p253 = scmp.ne.s32.totalorder %s238, %s252
      %p254 = scmp.eq.s32.totalorder %s29, 0
      %p255 = por %p253, %p254
      %s256 = ssub.s32 %s23, %s30
      %p257 = scmp.eq.s32.totalorder %s256, 0
      %s259 = sadd.s32 %s258, 1
      %s260 = scalar_select %p257, %s258, %s259
      %p263 = pneg %p257
      %p264 = scmp.eq.s32.totalorder %s23, 1
      %p265 = por %p263, %p264
      %p266 = scmp.ne.s32.totalorder %s258, %s261
      %p267 = scmp.eq.s32.totalorder %s23, 0
      %p268 = por %p266, %p267
      %p269 = scmp.ne.s32.totalorder %s258, %s261
      %p270 = scmp.eq.s32.totalorder %s28, 1
      %p271 = por %p269, %p270
      %p272 = scmp.ne.s32.totalorder %s261, %s262
      %p273 = scmp.eq.s32.totalorder %s28, 0
      %p274 = por %p272, %p273
      %p275 = scmp.ne.s32.totalorder %s261, %s262
      %p276 = scmp.eq.s32.totalorder %s29, 1
      %p277 = por %p275, %p276
      %p279 = scmp.ne.s32.totalorder %s262, %s278
      %p280 = scmp.eq.s32.totalorder %s29, 0
      %p281 = por %p279, %p280
      %p282 = scmp.le.s32.totalorder 1, %s23
      %p283 = scmp.lt.s32.totalorder %s23, 3
      %p284 = pnand %p282, %p283
      %p285 = pneg %p284
      // Predicated region
      $region9: #{tpu_custom_call.1} parent=5 // pred_check
        _
      $region10: #{tpu_custom_call.1} parent=5 // pred_check_branch
        %287 = sbr.rel (%p284) target = $region12
      $region11: #{tpu_custom_call.1} parent=5 // pred_region
        %s288 = ssub.s32 %s23, 1
        // Predicated region
        $region13: #{tpu_custom_call.1} parent=11 // pred_check
          %p289 = pneg %p122
        $region14: #{tpu_custom_call.1} parent=11 // pred_check_branch
          %291 = sbr.rel (%p289) target = $region16
        $region15: #{tpu_custom_call.1} parent=11 // pred_region
          %293 = vsyncadd [#allocation6], 0
          %s294 = sshll.u32 %s3, 4
          %s295 = int_to_ptr.hbm [resolvable:$true] %s294
          %s296 = sshll.u32 [#allocation5], 4
          %s297 = int_to_ptr.vmem [resolvable:$true] %s296
          %302 = dma.hbm_to_vmem [thread:$0]  %s295, 1024, %s297, [#allocation6], 128, 128, 8
        $region16: #{tpu_custom_call.1} parent=11 // pred_fallthru
          _
        // Predicated region
        $region17: #{tpu_custom_call.1} parent=11 // pred_check
          %p303 = pneg %p143
        $region18: #{tpu_custom_call.1} parent=11 // pred_check_branch
          %305 = sbr.rel (%p303) target = $region20
        $region19: #{tpu_custom_call.1} parent=11 // pred_region
          _
        $region20: #{tpu_custom_call.1} parent=11 // pred_fallthru
          _
        // Predicated region
        $region21: #{tpu_custom_call.1} parent=11 // pred_check
          %p306 = pneg %p164
        $region22: #{tpu_custom_call.1} parent=11 // pred_check_branch
          %308 = sbr.rel (%p306) target = $region24
        $region23: #{tpu_custom_call.1} parent=11 // pred_region
          _
        $region24: #{tpu_custom_call.1} parent=11 // pred_fallthru
          _
        // Predicated region
        $region25: #{tpu_custom_call.1} parent=11 // pred_check
          %p309 = pneg %p185
        $region26: #{tpu_custom_call.1} parent=11 // pred_check_branch
          %311 = sbr.rel (%p309) target = $region28
        $region27: #{tpu_custom_call.1} parent=11 // pred_region
          _
        $region28: #{tpu_custom_call.1} parent=11 // pred_fallthru
          _
        // Predicated region
        $region29: #{tpu_custom_call.1} parent=11 // pred_check
          %p312 = pneg %p206
        $region30: #{tpu_custom_call.1} parent=11 // pred_check_branch
          %314 = sbr.rel (%p312) target = $region32
        $region31: #{tpu_custom_call.1} parent=11 // pred_region
          _
        $region32: #{tpu_custom_call.1} parent=11 // pred_fallthru
          _
        // Predicated region
        $region33: #{tpu_custom_call.1} parent=11 // pred_check
          %p315 = pneg %p227
        $region34: #{tpu_custom_call.1} parent=11 // pred_check_branch
          %317 = sbr.rel (%p315) target = $region36
        $region35: #{tpu_custom_call.1} parent=11 // pred_region
          %319 = vsyncadd [#allocation6], 0
          %s320 = sshll.u32 %s8, 4
          %s321 = int_to_ptr.hbm [resolvable:$true] %s320
          %s322 = sshll.u32 [#allocation7], 4
          %s323 = int_to_ptr.vmem [resolvable:$true] %s322
          %328 = dma.hbm_to_vmem [thread:$0]  %s321, 1024, %s323, [#allocation6], 64, 64, 4
        $region36: #{tpu_custom_call.1} parent=11 // pred_fallthru
          _
        // Predicated region
        $region37: #{tpu_custom_call.1} parent=11 // pred_check
          %p329 = pneg %p248
        $region38: #{tpu_custom_call.1} parent=11 // pred_check_branch
          %331 = sbr.rel (%p329) target = $region40
        $region39: #{tpu_custom_call.1} parent=11 // pred_region
          _
        $region40: #{tpu_custom_call.1} parent=11 // pred_fallthru
          _
      $region12: #{tpu_custom_call.1} parent=5 // pred_fallthru
        _
      %p332 = scmp.lt.s32.totalorder %s23, 2
      // Predicated region
      $region41: #{tpu_custom_call.1} parent=5 // pred_check
        %p333 = pneg %p332
      $region42: #{tpu_custom_call.1} parent=5 // pred_check_branch
        %335 = sbr.rel (%p333) target = $region44
      $region43: #{tpu_custom_call.1} parent=5 // pred_region
        // Predicated region
        $region45: #{tpu_custom_call.1} parent=43 // pred_check
          %p336 = pneg %p43
        $region46: #{tpu_custom_call.1} parent=43 // pred_check_branch
          %338 = sbr.rel (%p336) target = $region48
        $region47: #{tpu_custom_call.1} parent=43 // pred_region
          %s339 = sand.u32 %s33, 1
          %s340 = scalar_lea.sflag [#allocation3], %s339
          %s341 = sand.u32 %s33, 1
          %s342 = smul.addr %s341, 32
          %s343 = scalar_lea.vmem [#allocation2], %s342
          %s344 = smul.u32 8, %s23
          %346 = vsyncadd %s340, 0
          %s347 = smul.addr %s344, 4
          %s348 = scalar_lea.hbm %s0, %s347
          %s349 = sshll.u32 %s348, 4
          %s350 = int_to_ptr.hbm [resolvable:$true] %s349
          %s351 = sshll.u32 %s343, 4
          %s352 = int_to_ptr.vmem [resolvable:$true] %s351
          %357 = dma.hbm_to_vmem [thread:$0]  %s350, 512, %s352, %s340, 64, 64, 4
        $region48: #{tpu_custom_call.1} parent=43 // pred_fallthru
          _
        // Predicated region
        $region49: #{tpu_custom_call.1} parent=43 // pred_check
          %p358 = pneg %p69
        $region50: #{tpu_custom_call.1} parent=43 // pred_check_branch
          %360 = sbr.rel (%p358) target = $region52
        $region51: #{tpu_custom_call.1} parent=43 // pred_region
          %s361 = smul.u32 8, %s23
          %p362 = scmp.lt.s32.totalorder %s361, 15
          %s363 = scalar_select %p362, %s361, 15
          %s364 = smul.addr %s363, 8
          %s365 = scalar_lea.vmem %s1, %s364
          %s366 = smul.u32 8, %s23
        $region52: #{tpu_custom_call.1} parent=43 // pred_fallthru
          _
        // Predicated region
        $region53: #{tpu_custom_call.1} parent=43 // pred_check
          %p367 = pneg %p95
        $region54: #{tpu_custom_call.1} parent=43 // pred_check_branch
          %369 = sbr.rel (%p367) target = $region56
        $region55: #{tpu_custom_call.1} parent=43 // pred_region
          %s370 = smul.u32 8, %s23
          %p371 = scmp.lt.s32.totalorder %s370, 15
          %s372 = scalar_select %p371, %s370, 15
          %s373 = smul.addr %s372, 4
          %s374 = scalar_lea.vmem %s2, %s373
          %s375 = smul.u32 8, %s23
        $region56: #{tpu_custom_call.1} parent=43 // pred_fallthru
          _
      $region44: #{tpu_custom_call.1} parent=5 // pred_fallthru
        _
      %p376 = scmp.le.s32.totalorder 1, %s23
      %p377 = scmp.lt.s32.totalorder %s23, 3
      %p378 = pnand %p376, %p377
      %p379 = pneg %p378
      // Predicated region
      $region57: #{tpu_custom_call.1} parent=5 // pred_check
        _
      $region58: #{tpu_custom_call.1} parent=5 // pred_check_branch
        %381 = sbr.rel (%p378) target = $region60
      $region59: #{tpu_custom_call.1} parent=5 // pred_region
        %s382 = ssub.s32 %s23, 1
        %s383 = sand.u32 %s36, 1
        %s384 = scalar_lea.sflag [#allocation3], %s383
        %s385 = sand.u32 %s36, 1
        %s386 = smul.addr %s385, 32
        %s387 = scalar_lea.vmem [#allocation2], %s386
        // Predicated region
        $region61: #{tpu_custom_call.1} parent=59 // pred_check
          %p388 = pneg %p49
        $region62: #{tpu_custom_call.1} parent=59 // pred_check_branch
          %390 = sbr.rel (%p388) target = $region64
        $region63: #{tpu_custom_call.1} parent=59 // pred_region
          %392 = dma.done %s384, 512
        $region64: #{tpu_custom_call.1} parent=59 // pred_fallthru
          _
        // Predicated region
        $region65: #{tpu_custom_call.1} parent=59 // pred_check
          %p393 = pneg %p122
        $region66: #{tpu_custom_call.1} parent=59 // pred_check_branch
          %395 = sbr.rel (%p393) target = $region68
        $region67: #{tpu_custom_call.1} parent=59 // pred_region
          %397 = dma.done [#allocation6], 1024
        $region68: #{tpu_custom_call.1} parent=59 // pred_fallthru
          _
        // Predicated region
        $region69: #{tpu_custom_call.1} parent=59 // pred_check
          %p398 = pneg %p227
        $region70: #{tpu_custom_call.1} parent=59 // pred_check_branch
          %400 = sbr.rel (%p398) target = $region72
        $region71: #{tpu_custom_call.1} parent=59 // pred_region
          %402 = dma.done [#allocation6], 1024
        $region72: #{tpu_custom_call.1} parent=59 // pred_fallthru
          _
        %s403 = sand.u32 %s36, 1
        %s404 = scalar_lea.sflag [#allocation3], %s403
        %s405 = sand.u32 %s36, 1
        %s406 = smul.addr %s405, 32
        %s407 = scalar_lea.vmem [#allocation2], %s406
        %p408 = pneg %p49
        %p409 = pneg %p46
        %s410 = smul.u32 8, %s28
        %p411 = scmp.lt.s32.totalorder %s410, 15
        %s412 = scalar_select %p411, %s410, 15
        %s413 = smul.addr %s412, 8
        %s414 = scalar_lea.vmem %s1, %s413
        %p415 = pneg %p75
        %p416 = pneg %p72
        %s417 = smul.u32 8, %s28
        %p418 = scmp.lt.s32.totalorder %s417, 15
        %s419 = scalar_select %p418, %s417, 15
        %s420 = smul.addr %s419, 4
        %s421 = scalar_lea.vmem %s2, %s420
        %p422 = pneg %p101
        %p423 = pneg %p98
        %p424 = pneg %p122
        %p425 = pneg %p119
        %p426 = pneg %p143
        %p427 = pneg %p140
        %p428 = pneg %p164
        %p429 = pneg %p161
        %p430 = pneg %p185
        %p431 = pneg %p182
        %p432 = pneg %p206
        %p433 = pneg %p203
        %p434 = pneg %p227
        %p435 = pneg %p224
        %p436 = pneg %p248
        %p437 = pneg %p245
        %p438 = pneg %p274
        %p439 = pneg %p271
        %s440 = sand.u32 %s261, 1
        %s441 = scalar_lea.sflag [#allocation4], %s440
        %s442 = sand.u32 %s261, 1
        %s443 = smul.addr %s442, 64
        %s444 = scalar_lea.vmem [#allocation8], %s443
        %s445 = smul.u32 8, %s28
        %s446 = smul.u32 8, %s28
        %p447 = scmp.lt.s32.totalorder %s446, 15
        %s448 = scalar_select %p447, %s446, 15
        %s449 = smul.addr %s448, 8
        %s450 = scalar_lea.vmem %s1, %s449
        %s451 = smul.u32 8, %s28
        %s452 = smul.u32 8, %s28
        %p453 = scmp.lt.s32.totalorder %s452, 15
        %s454 = scalar_select %p453, %s452, 15
        %s455 = smul.addr %s454, 4
        %s456 = scalar_lea.vmem %s2, %s455
        %s457 = smul.u32 8, %s28
        %s458 = smul.u32 8, %s28
        %v460 = vlaneseq
        %v461 = vand.u32 %v460, 127
        %v462 = vld [vmem:[%s450] sm:$0xff]
        %v463 = vld [vmem:[%s450 + $0x8] sm:$0xff]
        %v464 = vld [vmem:[%s450 + $0x10] sm:$0xff]
        %v465 = vld [vmem:[%s450 + $0x18] sm:$0xff]
        %v466 = vld [vmem:[%s450 + $0x20] sm:$0xff]
        %v467 = vld [vmem:[%s450 + $0x28] sm:$0xff]
        %v468 = vld [vmem:[%s450 + $0x30] sm:$0xff]
        %v469 = vld [vmem:[%s450 + $0x38] sm:$0xff]
        %470 = vset.pattern.permute.xlu0 0
        %471 = vperm.xlu0 %470, %v462
        %v472 = vpop.permute.xlu0 %471
        %473 = vset.pattern.permute.xlu0 0
        %474 = vperm.xlu0 %473, %v463
        %v475 = vpop.permute.xlu0 %474
        %476 = vset.pattern.permute.xlu0 0
        %477 = vperm.xlu0 %476, %v464
        %v478 = vpop.permute.xlu0 %477
        %479 = vset.pattern.permute.xlu0 0
        %480 = vperm.xlu0 %479, %v465
        %v481 = vpop.permute.xlu0 %480
        %482 = vset.pattern.permute.xlu0 0
        %483 = vperm.xlu0 %482, %v466
        %v484 = vpop.permute.xlu0 %483
        %485 = vset.pattern.permute.xlu0 0
        %486 = vperm.xlu0 %485, %v467
        %v487 = vpop.permute.xlu0 %486
        %488 = vset.pattern.permute.xlu0 0
        %489 = vperm.xlu0 %488, %v468
        %v490 = vpop.permute.xlu0 %489
        %491 = vset.pattern.permute.xlu0 0
        %492 = vperm.xlu0 %491, %v469
        %v493 = vpop.permute.xlu0 %492
        %vm494 = vcmp.eq.s32.totalorder %v472, %v461
        %vm495 = vcmp.eq.s32.totalorder %v475, %v461
        %vm496 = vcmp.eq.s32.totalorder %v478, %v461
        %vm497 = vcmp.eq.s32.totalorder %v481, %v461
        %vm498 = vcmp.eq.s32.totalorder %v484, %v461
        %vm499 = vcmp.eq.s32.totalorder %v487, %v461
        %vm500 = vcmp.eq.s32.totalorder %v490, %v461
        %vm501 = vcmp.eq.s32.totalorder %v493, %v461
        %v502 = vsel %vm494, 1, 0
        %v503 = vsel %vm495, 1, 0
        %v504 = vsel %vm496, 1, 0
        %v505 = vsel %vm497, 1, 0
        %v506 = vsel %vm498, 1, 0
        %v507 = vsel %vm499, 1, 0
        %v508 = vsel %vm500, 1, 0
        %v509 = vsel %vm501, 1, 0
        %v510 = vcvt.s32.f32 %v502
        %v511 = vcvt.s32.f32 %v503
        %v512 = vcvt.s32.f32 %v504
        %v513 = vcvt.s32.f32 %v505
        %v514 = vcvt.s32.f32 %v506
        %v515 = vcvt.s32.f32 %v507
        %v516 = vcvt.s32.f32 %v508
        %v517 = vcvt.s32.f32 %v509
        %v518 = vpack.c.bf16 %v511, %v510
        %v519 = vpack.c.bf16 %v513, %v512
        %v520 = vpack.c.bf16 %v515, %v514
        %v521 = vpack.c.bf16 %v517, %v516
        %v522 = vld [vmem:[%s4] sm:$0xf]
        %v523 = vld [vmem:[%s4 + $0x4] sm:$0xf]
        %v526 = vunpack.c.l.b16 %v522
        %v527 = vunpack.c.l.b16 %v523
        %v528 = vpack.c.b16 %v527, %v526
        %vm530 = vcmask 130048
        %v532 = vsel %vm530, %v518, 0
        %v535 = vsel %vm530, %v519, 0
        %v538 = vsel %vm530, %v520, 0
        %v541 = vsel %vm530, %v521, 0
        %543 = vmatpush.bf16.msra.mxu0 0
        %544 = vmatpush.bf16.msra.mxu0 0
        %545 = vmatpush.bf16.msra.mxu0 0
        %546 = vmatpush.bf16.msra.mxu0 0
        %547 = vmatpush.bf16.msra.mxu0 0
        %548 = vmatpush.bf16.msra.mxu0 0
        %549 = vmatpush.bf16.msra.mxu0 0
        %550 = vmatpush.bf16.msra.mxu0 %v528
        %551 = vmatmul.bf16.gmra.mxu0 %v532
        %v552 = vpop.f32.mrf.mxu0
        %v553 = vadd.f32 0.0, %v552
        %v554 = vpop.f32.mrf.mxu0
        %v555 = vadd.f32 0.0, %v554
        %556 = vmatmul.bf16.gmra.mxu0 %v535
        %v557 = vpop.f32.mrf.mxu0
        %v558 = vadd.f32 0.0, %v557
        %v559 = vpop.f32.mrf.mxu0
        %v560 = vadd.f32 0.0, %v559
        %561 = vmatmul.bf16.gmra.mxu0 %v538
        %v562 = vpop.f32.mrf.mxu0
        %v563 = vadd.f32 0.0, %v562
        %v564 = vpop.f32.mrf.mxu0
        %v565 = vadd.f32 0.0, %v564
        %566 = vmatmul.bf16.gmra.mxu0 %v541
        %v567 = vpop.f32.mrf.mxu0
        %v568 = vadd.f32 0.0, %v567
        %v569 = vpop.f32.mrf.mxu0
        %v570 = vadd.f32 0.0, %v569
        %571 = vdwg.mxu0
        %v572 = vld [vmem:[%s387] sm:$0xf]
        %v573 = vld [vmem:[%s387 + $0x4] sm:$0xf]
        %v574 = vld [vmem:[%s387 + $0x8] sm:$0xf]
        %v575 = vld [vmem:[%s387 + $0xc] sm:$0xf]
        %v576 = vld [vmem:[%s387 + $0x10] sm:$0xf]
        %v577 = vld [vmem:[%s387 + $0x14] sm:$0xf]
        %v578 = vld [vmem:[%s387 + $0x18] sm:$0xf]
        %v579 = vld [vmem:[%s387 + $0x1c] sm:$0xf]
        %v580 = vunpack.c.l.bf16 %v572
        %v581 = vunpack.c.l.bf16 %v573
        %v582 = vunpack.c.l.bf16 %v574
        %v583 = vunpack.c.l.bf16 %v575
        %v584 = vunpack.c.l.bf16 %v576
        %v585 = vunpack.c.l.bf16 %v577
        %v586 = vunpack.c.l.bf16 %v578
        %v587 = vunpack.c.l.bf16 %v579
        %v588 = vadd.f32 %v580, %v553
        %v589 = vadd.f32 %v581, %v555
        %v590 = vadd.f32 %v582, %v558
        %v591 = vadd.f32 %v583, %v560
        %v592 = vadd.f32 %v584, %v563
        %v593 = vadd.f32 %v585, %v565
        %v594 = vadd.f32 %v586, %v568
        %v595 = vadd.f32 %v587, %v570
        %v596 = vpack.c.bf16 %v589, %v588
        %v597 = vpack.c.bf16 %v591, %v590
        %v598 = vpack.c.bf16 %v593, %v592
        %v599 = vpack.c.bf16 %v595, %v594
        %v600 = vld [vmem:[%s5] sm:$0xff]
        %v601 = vld [vmem:[%s5 + $0x8] sm:$0xf]
        %v602 = vld [vmem:[%s5 + $0xc] sm:$0xff]
        %v603 = vld [vmem:[%s5 + $0x14] sm:$0xf]
        %v604 = vld [vmem:[%s5 + $0x18] sm:$0xff]
        %v605 = vld [vmem:[%s5 + $0x20] sm:$0xf]
        %v606 = vld [vmem:[%s5 + $0x24] sm:$0xff]
        %v607 = vld [vmem:[%s5 + $0x2c] sm:$0xf]
        %v608 = vld [vmem:[%s5 + $0x30] sm:$0xff]
        %v609 = vld [vmem:[%s5 + $0x38] sm:$0xf]
        %v610 = vld [vmem:[%s5 + $0x3c] sm:$0xff]
        %v611 = vld [vmem:[%s5 + $0x44] sm:$0xf]
        %v612 = vld [vmem:[%s5 + $0x48] sm:$0xff]
        %v613 = vld [vmem:[%s5 + $0x50] sm:$0xf]
        %v614 = vld [vmem:[%s5 + $0x54] sm:$0xff]
        %v615 = vld [vmem:[%s5 + $0x5c] sm:$0xf]
        %v616 = vld [vmem:[%s5 + $0x60] sm:$0xff]
        %v617 = vld [vmem:[%s5 + $0x68] sm:$0xf]
        %v618 = vld [vmem:[%s5 + $0x6c] sm:$0xff]
        %v619 = vld [vmem:[%s5 + $0x74] sm:$0xf]
        %v620 = vld [vmem:[%s5 + $0x78] sm:$0xff]
        %v621 = vld [vmem:[%s5 + $0x80] sm:$0xf]
        %v622 = vld [vmem:[%s5 + $0x84] sm:$0xff]
        %v623 = vld [vmem:[%s5 + $0x8c] sm:$0xf]
        %v624 = vld [vmem:[%s5 + $0x90] sm:$0xff]
        %v625 = vld [vmem:[%s5 + $0x98] sm:$0xf]
        %v626 = vld [vmem:[%s5 + $0x9c] sm:$0xff]
        %v627 = vld [vmem:[%s5 + $0xa4] sm:$0xf]
        %v628 = vld [vmem:[%s5 + $0xa8] sm:$0xff]
        %v629 = vld [vmem:[%s5 + $0xb0] sm:$0xf]
        %v630 = vld [vmem:[%s5 + $0xb4] sm:$0xff]
        %v631 = vld [vmem:[%s5 + $0xbc] sm:$0xf]
        %v632 = vld [vmem:[%s6] sm:$0x7]
        %v634 = vperm.slane %v632, 0
        %v635 = vperm.slane %v632, 1
        %v636 = vperm.slane %v632, 2
        %v672 = vunpack.c.l.b16 %v600
        %v673 = vunpack.c.h.b16 %v600
        %v674 = vunpack.c.l.b16 %v601
        %v675 = vunpack.c.l.b16 %v602
        %v676 = vunpack.c.h.b16 %v602
        %v677 = vunpack.c.l.b16 %v603
        %v678 = vunpack.c.l.b16 %v604
        %v679 = vunpack.c.h.b16 %v604
        %v680 = vunpack.c.l.b16 %v605
        %v681 = vunpack.c.l.b16 %v606
        %v682 = vunpack.c.h.b16 %v606
        %v683 = vunpack.c.l.b16 %v607
        %v684 = vunpack.c.l.b16 %v608
        %v685 = vunpack.c.h.b16 %v608
        %v686 = vunpack.c.l.b16 %v609
        %v687 = vunpack.c.l.b16 %v610
        %v688 = vunpack.c.h.b16 %v610
        %v689 = vunpack.c.l.b16 %v611
        %v690 = vunpack.c.l.b16 %v612
        %v691 = vunpack.c.h.b16 %v612
        %v692 = vunpack.c.l.b16 %v613
        %v693 = vunpack.c.l.b16 %v614
        %v694 = vunpack.c.h.b16 %v614
        %v695 = vunpack.c.l.b16 %v615
        %v696 = vunpack.c.l.b16 %v616
        %v697 = vunpack.c.h.b16 %v616
        %v698 = vunpack.c.l.b16 %v617
        %v699 = vunpack.c.l.b16 %v618
        %v700 = vunpack.c.h.b16 %v618
        %v701 = vunpack.c.l.b16 %v619
        %v702 = vunpack.c.l.b16 %v620
        %v703 = vunpack.c.h.b16 %v620
        %v704 = vunpack.c.l.b16 %v621
        %v705 = vunpack.c.l.b16 %v622
        %v706 = vunpack.c.h.b16 %v622
        %v707 = vunpack.c.l.b16 %v623
        %v708 = vunpack.c.l.b16 %v624
        %v709 = vunpack.c.h.b16 %v624
        %v710 = vunpack.c.l.b16 %v625
        %v711 = vunpack.c.l.b16 %v626
        %v712 = vunpack.c.h.b16 %v626
        %v713 = vunpack.c.l.b16 %v627
        %v714 = vunpack.c.l.b16 %v628
        %v715 = vunpack.c.h.b16 %v628
        %v716 = vunpack.c.l.b16 %v629
        %v717 = vunpack.c.l.b16 %v630
        %v718 = vunpack.c.h.b16 %v630
        %v719 = vunpack.c.l.b16 %v631
        %v720 = vpack.c.b16 %v675, %v672
        %v721 = vpack.c.b16 %v676, %v673
        %v722 = vpack.c.b16 %v677, %v674
        %v723 = vpack.c.b16 %v681, %v678
        %v724 = vpack.c.b16 %v682, %v679
        %v725 = vpack.c.b16 %v683, %v680
        %v726 = vpack.c.b16 %v687, %v684
        %v727 = vpack.c.b16 %v688, %v685
        %v728 = vpack.c.b16 %v689, %v686
        %v729 = vpack.c.b16 %v693, %v690
        %v730 = vpack.c.b16 %v694, %v691
        %v731 = vpack.c.b16 %v695, %v692
        %v732 = vpack.c.b16 %v699, %v696
        %v733 = vpack.c.b16 %v700, %v697
        %v734 = vpack.c.b16 %v701, %v698
        %v735 = vpack.c.b16 %v705, %v702
        %v736 = vpack.c.b16 %v706, %v703
        %v737 = vpack.c.b16 %v707, %v704
        %v738 = vpack.c.b16 %v711, %v708
        %v739 = vpack.c.b16 %v712, %v709
        %v740 = vpack.c.b16 %v713, %v710
        %v741 = vpack.c.b16 %v717, %v714
        %v742 = vpack.c.b16 %v718, %v715
        %v743 = vpack.c.b16 %v719, %v716
        %768 = vmatpush.bf16.msra.mxu0 %v741
        %769 = vmatpush.bf16.msra.mxu0 %v738
        %770 = vmatpush.bf16.msra.mxu0 %v735
        %771 = vmatpush.bf16.msra.mxu0 %v732
        %772 = vmatpush.bf16.msra.mxu0 %v729
        %773 = vmatpush.bf16.msra.mxu0 %v726
        %774 = vmatpush.bf16.msra.mxu0 %v723
        %775 = vmatpush.bf16.msra.mxu0 %v720
        %776 = vmatmul.bf16.gmra.mxu0 %v596
        %v777 = vpop.f32.mrf.mxu0
        %v778 = vadd.f32 %v634, %v777
        %v779 = vpop.f32.mrf.mxu0
        %v780 = vadd.f32 %v634, %v779
        %781 = vmatmul.bf16.gmra.mxu0 %v597
        %v782 = vpop.f32.mrf.mxu0
        %v783 = vadd.f32 %v634, %v782
        %v784 = vpop.f32.mrf.mxu0
        %v785 = vadd.f32 %v634, %v784
        %786 = vmatmul.bf16.gmra.mxu0 %v598
        %v787 = vpop.f32.mrf.mxu0
        %v788 = vadd.f32 %v634, %v787
        %v789 = vpop.f32.mrf.mxu0
        %v790 = vadd.f32 %v634, %v789
        %791 = vmatmul.bf16.gmra.mxu0 %v599
        %v792 = vpop.f32.mrf.mxu0
        %v793 = vadd.f32 %v634, %v792
        %v794 = vpop.f32.mrf.mxu0
        %v795 = vadd.f32 %v634, %v794
        %796 = vdwg.mxu0
        %797 = vmatpush.bf16.msra.mxu0 %v742
        %798 = vmatpush.bf16.msra.mxu0 %v739
        %799 = vmatpush.bf16.msra.mxu0 %v736
        %800 = vmatpush.bf16.msra.mxu0 %v733
        %801 = vmatpush.bf16.msra.mxu0 %v730
        %802 = vmatpush.bf16.msra.mxu0 %v727
        %803 = vmatpush.bf16.msra.mxu0 %v724
        %804 = vmatpush.bf16.msra.mxu0 %v721
        %805 = vmatmul.bf16.gmra.mxu0 %v596
        %v806 = vpop.f32.mrf.mxu0
        %v807 = vadd.f32 %v635, %v806
        %v808 = vpop.f32.mrf.mxu0
        %v809 = vadd.f32 %v635, %v808
        %810 = vmatmul.bf16.gmra.mxu0 %v597
        %v811 = vpop.f32.mrf.mxu0
        %v812 = vadd.f32 %v635, %v811
        %v813 = vpop.f32.mrf.mxu0
        %v814 = vadd.f32 %v635, %v813
        %815 = vmatmul.bf16.gmra.mxu0 %v598
        %v816 = vpop.f32.mrf.mxu0
        %v817 = vadd.f32 %v635, %v816
        %v818 = vpop.f32.mrf.mxu0
        %v819 = vadd.f32 %v635, %v818
        %820 = vmatmul.bf16.gmra.mxu0 %v599
        %v821 = vpop.f32.mrf.mxu0
        %v822 = vadd.f32 %v635, %v821
        %v823 = vpop.f32.mrf.mxu0
        %v824 = vadd.f32 %v635, %v823
        %825 = vdwg.mxu0
        %826 = vmatpush.bf16.msra.mxu0 %v743
        %827 = vmatpush.bf16.msra.mxu0 %v740
        %828 = vmatpush.bf16.msra.mxu0 %v737
        %829 = vmatpush.bf16.msra.mxu0 %v734
        %830 = vmatpush.bf16.msra.mxu0 %v731
        %831 = vmatpush.bf16.msra.mxu0 %v728
        %832 = vmatpush.bf16.msra.mxu0 %v725
        %833 = vmatpush.bf16.msra.mxu0 %v722
        %834 = vmatmul.bf16.gmra.mxu0 %v596
        %v835 = vpop.f32.mrf.mxu0
        %v836 = vadd.f32 %v636, %v835
        %v837 = vpop.f32.mrf.mxu0
        %v838 = vadd.f32 %v636, %v837
        %839 = vmatmul.bf16.gmra.mxu0 %v597
        %v840 = vpop.f32.mrf.mxu0
        %v841 = vadd.f32 %v636, %v840
        %v842 = vpop.f32.mrf.mxu0
        %v843 = vadd.f32 %v636, %v842
        %844 = vmatmul.bf16.gmra.mxu0 %v598
        %v845 = vpop.f32.mrf.mxu0
        %v846 = vadd.f32 %v636, %v845
        %v847 = vpop.f32.mrf.mxu0
        %v848 = vadd.f32 %v636, %v847
        %849 = vmatmul.bf16.gmra.mxu0 %v599
        %v850 = vpop.f32.mrf.mxu0
        %v851 = vadd.f32 %v636, %v850
        %v852 = vpop.f32.mrf.mxu0
        %v853 = vadd.f32 %v636, %v852
        %854 = vdwg.mxu0
        %v855 = vpack.c.bf16 %v778, %v778
        %v856 = vpack.c.bf16 %v780, %v780
        %v857 = vpack.c.bf16 %v783, %v783
        %v858 = vpack.c.bf16 %v785, %v785
        %v859 = vpack.c.bf16 %v788, %v788
        %v860 = vpack.c.bf16 %v790, %v790
        %v861 = vpack.c.bf16 %v793, %v793
        %v862 = vpack.c.bf16 %v795, %v795
        %v863 = vpack.c.bf16 %v809, %v807
        %v864 = vpack.c.bf16 %v814, %v812
        %v865 = vpack.c.bf16 %v819, %v817
        %v866 = vpack.c.bf16 %v824, %v822
        %v867 = vpack.c.bf16 %v836, %v836
        %v868 = vpack.c.bf16 %v838, %v838
        %v869 = vpack.c.bf16 %v841, %v841
        %v870 = vpack.c.bf16 %v843, %v843
        %v871 = vpack.c.bf16 %v846, %v846
        %v872 = vpack.c.bf16 %v848, %v848
        %v873 = vpack.c.bf16 %v851, %v851
        %v874 = vpack.c.bf16 %v853, %v853
        %v875 = vld [vmem:[#allocation5] sm:$0xff]
        %v876 = vld [vmem:[#allocation5 + $0x8] sm:$0xff]
        %v877 = vld [vmem:[#allocation5 + $0x10] sm:$0xff]
        %v878 = vld [vmem:[#allocation5 + $0x18] sm:$0xff]
        %v879 = vld [vmem:[#allocation5 + $0x20] sm:$0xff]
        %v880 = vld [vmem:[#allocation5 + $0x28] sm:$0xff]
        %v881 = vld [vmem:[#allocation5 + $0x30] sm:$0xff]
        %v882 = vld [vmem:[#allocation5 + $0x38] sm:$0xff]
        %v883 = vld [vmem:[%s7] sm:$0x1]
        %v885 = vpack.i.b16 %v883, %v883
        %v887 = vperm.slane %v885, 0
        %v888 = vunpack.c.l.bf16 %v855
        %v889 = vunpack.c.l.bf16 %v856
        %v890 = vunpack.c.l.bf16 %v857
        %v891 = vunpack.c.l.bf16 %v858
        %v892 = vunpack.c.l.bf16 %v859
        %v893 = vunpack.c.l.bf16 %v860
        %v894 = vunpack.c.l.bf16 %v861
        %v895 = vunpack.c.l.bf16 %v862
        %v896 = vunpack.c.l.bf16 %v887
        %v897 = vmul.f32 %v888, %v896
        %v898 = vmul.f32 %v889, %v896
        %v899 = vmul.f32 %v890, %v896
        %v900 = vmul.f32 %v891, %v896
        %v901 = vmul.f32 %v892, %v896
        %v902 = vmul.f32 %v893, %v896
        %v903 = vmul.f32 %v894, %v896
        %v904 = vmul.f32 %v895, %v896
        %v905 = vpack.c.bf16 %v898, %v897
        %v906 = vpack.c.bf16 %v900, %v899
        %v907 = vpack.c.bf16 %v902, %v901
        %v908 = vpack.c.bf16 %v904, %v903
        %909 = vmatpush.bf16.xpose.msra.mxu0 0
        %910 = vmatpush.bf16.xpose.msra.mxu0 0
        %911 = vmatpush.bf16.xpose.msra.mxu0 0
        %912 = vmatpush.bf16.xpose.msra.mxu0 0
        %913 = vmatpush.bf16.xpose.msra.mxu0 %v866
        %914 = vmatpush.bf16.xpose.msra.mxu0 %v865
        %915 = vmatpush.bf16.xpose.msra.mxu0 %v864
        %916 = vmatpush.bf16.xpose.msra.mxu0 %v863
        %917 = vmatmul.bf16.gmra.mxu0 %v905
        %v918 = vpop.f32.mrf.mxu0
        %v919 = vadd.f32 %v875, %v918
        %v920 = vpop.f32.mrf.mxu0
        %v921 = vadd.f32 %v876, %v920
        %922 = vmatmul.bf16.gmra.mxu0 %v906
        %v923 = vpop.f32.mrf.mxu0
        %v924 = vadd.f32 %v877, %v923
        %v925 = vpop.f32.mrf.mxu0
        %v926 = vadd.f32 %v878, %v925
        %927 = vmatmul.bf16.gmra.mxu0 %v907
        %v928 = vpop.f32.mrf.mxu0
        %v929 = vadd.f32 %v879, %v928
        %v930 = vpop.f32.mrf.mxu0
        %v931 = vadd.f32 %v880, %v930
        %932 = vmatmul.bf16.gmra.mxu0 %v908
        %v933 = vpop.f32.mrf.mxu0
        %v934 = vadd.f32 %v881, %v933
        %v935 = vpop.f32.mrf.mxu0
        %v936 = vadd.f32 %v882, %v935
        %937 = vdwg.mxu0
        %vm938 = vcmask 523264
        %v939 = vsel %vm938, %v919, -inf
        %940 = vmax.xlane.f32.xlu0 %v939
        %v941 = vpop.xlane.xlu0 %940
        %v942 = vsel %vm938, %v921, -inf
        %943 = vmax.xlane.f32.xlu0 %v942
        %v944 = vpop.xlane.xlu0 %943
        %v945 = vsel %vm938, %v924, -inf
        %946 = vmax.xlane.f32.xlu0 %v945
        %v947 = vpop.xlane.xlu0 %946
        %v948 = vsel %vm938, %v926, -inf
        %949 = vmax.xlane.f32.xlu0 %v948
        %v950 = vpop.xlane.xlu0 %949
        %v951 = vsel %vm938, %v929, -inf
        %952 = vmax.xlane.f32.xlu0 %v951
        %v953 = vpop.xlane.xlu0 %952
        %v954 = vsel %vm938, %v931, -inf
        %955 = vmax.xlane.f32.xlu0 %v954
        %v956 = vpop.xlane.xlu0 %955
        %v957 = vsel %vm938, %v934, -inf
        %958 = vmax.xlane.f32.xlu0 %v957
        %v959 = vpop.xlane.xlu0 %958
        %v960 = vsel %vm938, %v936, -inf
        %961 = vmax.xlane.f32.xlu0 %v960
        %v962 = vpop.xlane.xlu0 %961
        %v963 = vsub.f32 %v919, %v941
        %v964 = vsub.f32 %v921, %v944
        %v965 = vsub.f32 %v924, %v947
        %v966 = vsub.f32 %v926, %v950
        %v967 = vsub.f32 %v929, %v953
        %v968 = vsub.f32 %v931, %v956
        %v969 = vsub.f32 %v934, %v959
        %v970 = vsub.f32 %v936, %v962
        %v971 = vmul.f32 %v963, 1.442695
        %v972 = vpow.pop %v971
        %v973 = vmul.f32 %v964, 1.442695
        %v974 = vpow.pop %v973
        %v975 = vmul.f32 %v965, 1.442695
        %v976 = vpow.pop %v975
        %v977 = vmul.f32 %v966, 1.442695
        %v978 = vpow.pop %v977
        %v979 = vmul.f32 %v967, 1.442695
        %v980 = vpow.pop %v979
        %v981 = vmul.f32 %v968, 1.442695
        %v982 = vpow.pop %v981
        %v983 = vmul.f32 %v969, 1.442695
        %v984 = vpow.pop %v983
        %v985 = vmul.f32 %v970, 1.442695
        %v986 = vpow.pop %v985
        %v987 = vsel %vm938, %v972, 0.0
        %988 = vadd.xlane.f32.xlu0 %v987
        %v989 = vpop.xlane.xlu0 %988
        %v990 = vsel %vm938, %v974, 0.0
        %991 = vadd.xlane.f32.xlu0 %v990
        %v992 = vpop.xlane.xlu0 %991
        %v993 = vsel %vm938, %v976, 0.0
        %994 = vadd.xlane.f32.xlu0 %v993
        %v995 = vpop.xlane.xlu0 %994
        %v996 = vsel %vm938, %v978, 0.0
        %997 = vadd.xlane.f32.xlu0 %v996
        %v998 = vpop.xlane.xlu0 %997
        %v999 = vsel %vm938, %v980, 0.0
        %1000 = vadd.xlane.f32.xlu0 %v999
        %v1001 = vpop.xlane.xlu0 %1000
        %v1002 = vsel %vm938, %v982, 0.0
        %1003 = vadd.xlane.f32.xlu0 %v1002
        %v1004 = vpop.xlane.xlu0 %1003
        %v1005 = vsel %vm938, %v984, 0.0
        %1006 = vadd.xlane.f32.xlu0 %v1005
        %v1007 = vpop.xlane.xlu0 %1006
        %v1008 = vsel %vm938, %v986, 0.0
        %1009 = vadd.xlane.f32.xlu0 %v1008
        %v1010 = vpop.xlane.xlu0 %1009
        %v1011 = vrcp.pop %v989
        %v1012 = vrcp.pop %v992
        %v1013 = vrcp.pop %v995
        %v1014 = vrcp.pop %v998
        %v1015 = vrcp.pop %v1001
        %v1016 = vrcp.pop %v1004
        %v1017 = vrcp.pop %v1007
        %v1018 = vrcp.pop %v1010
        %v1019 = vmul.f32 %v972, %v1011
        %v1020 = vmul.f32 %v974, %v1012
        %v1021 = vmul.f32 %v976, %v1013
        %v1022 = vmul.f32 %v978, %v1014
        %v1023 = vmul.f32 %v980, %v1015
        %v1024 = vmul.f32 %v982, %v1016
        %v1025 = vmul.f32 %v984, %v1017
        %v1026 = vmul.f32 %v986, %v1018
        %v1027 = vpack.c.bf16 %v1020, %v1019
        %v1028 = vpack.c.bf16 %v1022, %v1021
        %v1029 = vpack.c.bf16 %v1024, %v1023
        %v1030 = vpack.c.bf16 %v1026, %v1025
        %v1031 = vunpack.c.l.bf16 %v867
        %v1032 = vunpack.c.l.bf16 %v868
        %v1033 = vunpack.c.l.bf16 %v869
        %v1034 = vunpack.c.l.bf16 %v870
        %v1035 = vunpack.c.l.bf16 %v871
        %v1036 = vunpack.c.l.bf16 %v872
        %v1037 = vunpack.c.l.bf16 %v873
        %v1038 = vunpack.c.l.bf16 %v874
        %v1039 = vmul.f32 %v1031, %v896
        %v1040 = vmul.f32 %v1032, %v896
        %v1041 = vmul.f32 %v1033, %v896
        %v1042 = vmul.f32 %v1034, %v896
        %v1043 = vmul.f32 %v1035, %v896
        %v1044 = vmul.f32 %v1036, %v896
        %v1045 = vmul.f32 %v1037, %v896
        %v1046 = vmul.f32 %v1038, %v896
        %v1047 = vpack.c.bf16 %v1040, %v1039
        %v1048 = vpack.c.bf16 %v1042, %v1041
        %v1049 = vpack.c.bf16 %v1044, %v1043
        %v1050 = vpack.c.bf16 %v1046, %v1045
        %s1051 = scalar_lea.vmem %s7, 1
        %v1052 = vld [vmem:[%s1051] sm:$0x1]
        %v1054 = vpack.i.b16 %v1052, %v1052
        %v1056 = vperm.slane %v1054, 0
        %v1057 = vunpack.c.l.bf16 %v1056
        %v1058 = vmul.f32 %v888, %v1057
        %v1059 = vmul.f32 %v889, %v1057
        %v1060 = vmul.f32 %v890, %v1057
        %v1061 = vmul.f32 %v891, %v1057
        %v1062 = vmul.f32 %v892, %v1057
        %v1063 = vmul.f32 %v893, %v1057
        %v1064 = vmul.f32 %v894, %v1057
        %v1065 = vmul.f32 %v895, %v1057
        %v1066 = vpack.c.bf16 %v1059, %v1058
        %v1067 = vpack.c.bf16 %v1061, %v1060
        %v1068 = vpack.c.bf16 %v1063, %v1062
        %v1069 = vpack.c.bf16 %v1065, %v1064
        %1070 = vmatpush.bf16.xpose.msra.mxu0 0
        %1071 = vmatpush.bf16.xpose.msra.mxu0 0
        %1072 = vmatpush.bf16.xpose.msra.mxu0 0
        %1073 = vmatpush.bf16.xpose.msra.mxu0 0
        %1074 = vmatpush.bf16.xpose.msra.mxu0 %v866
        %1075 = vmatpush.bf16.xpose.msra.mxu0 %v865
        %1076 = vmatpush.bf16.xpose.msra.mxu0 %v864
        %1077 = vmatpush.bf16.xpose.msra.mxu0 %v863
        %1078 = vmatmul.bf16.gmra.mxu0 %v1066
        %v1079 = vpop.f32.mrf.mxu0
        %v1080 = vadd.f32 %v875, %v1079
        %v1081 = vpop.f32.mrf.mxu0
        %v1082 = vadd.f32 %v876, %v1081
        %1083 = vmatmul.bf16.gmra.mxu0 %v1067
        %v1084 = vpop.f32.mrf.mxu0
        %v1085 = vadd.f32 %v877, %v1084
        %v1086 = vpop.f32.mrf.mxu0
        %v1087 = vadd.f32 %v878, %v1086
        %1088 = vmatmul.bf16.gmra.mxu0 %v1068
        %v1089 = vpop.f32.mrf.mxu0
        %v1090 = vadd.f32 %v879, %v1089
        %v1091 = vpop.f32.mrf.mxu0
        %v1092 = vadd.f32 %v880, %v1091
        %1093 = vmatmul.bf16.gmra.mxu0 %v1069
        %v1094 = vpop.f32.mrf.mxu0
        %v1095 = vadd.f32 %v881, %v1094
        %v1096 = vpop.f32.mrf.mxu0
        %v1097 = vadd.f32 %v882, %v1096
        %1098 = vdwg.mxu0
        %v1099 = vsel %vm938, %v1080, -inf
        %1100 = vmax.xlane.f32.xlu0 %v1099
        %v1101 = vpop.xlane.xlu0 %1100
        %v1102 = vsel %vm938, %v1082, -inf
        %1103 = vmax.xlane.f32.xlu0 %v1102
        %v1104 = vpop.xlane.xlu0 %1103
        %v1105 = vsel %vm938, %v1085, -inf
        %1106 = vmax.xlane.f32.xlu0 %v1105
        %v1107 = vpop.xlane.xlu0 %1106
        %v1108 = vsel %vm938, %v1087, -inf
        %1109 = vmax.xlane.f32.xlu0 %v1108
        %v1110 = vpop.xlane.xlu0 %1109
        %v1111 = vsel %vm938, %v1090, -inf
        %1112 = vmax.xlane.f32.xlu0 %v1111
        %v1113 = vpop.xlane.xlu0 %1112
        %v1114 = vsel %vm938, %v1092, -inf
        %1115 = vmax.xlane.f32.xlu0 %v1114
        %v1116 = vpop.xlane.xlu0 %1115
        %v1117 = vsel %vm938, %v1095, -inf
        %1118 = vmax.xlane.f32.xlu0 %v1117
        %v1119 = vpop.xlane.xlu0 %1118
        %v1120 = vsel %vm938, %v1097, -inf
        %1121 = vmax.xlane.f32.xlu0 %v1120
        %v1122 = vpop.xlane.xlu0 %1121
        %v1123 = vsub.f32 %v1080, %v1101
        %v1124 = vsub.f32 %v1082, %v1104
        %v1125 = vsub.f32 %v1085, %v1107
        %v1126 = vsub.f32 %v1087, %v1110
        %v1127 = vsub.f32 %v1090, %v1113
        %v1128 = vsub.f32 %v1092, %v1116
        %v1129 = vsub.f32 %v1095, %v1119
        %v1130 = vsub.f32 %v1097, %v1122
        %v1131 = vmul.f32 %v1123, 1.442695
        %v1132 = vpow.pop %v1131
        %v1133 = vmul.f32 %v1124, 1.442695
        %v1134 = vpow.pop %v1133
        %v1135 = vmul.f32 %v1125, 1.442695
        %v1136 = vpow.pop %v1135
        %v1137 = vmul.f32 %v1126, 1.442695
        %v1138 = vpow.pop %v1137
        %v1139 = vmul.f32 %v1127, 1.442695
        %v1140 = vpow.pop %v1139
        %v1141 = vmul.f32 %v1128, 1.442695
        %v1142 = vpow.pop %v1141
        %v1143 = vmul.f32 %v1129, 1.442695
        %v1144 = vpow.pop %v1143
        %v1145 = vmul.f32 %v1130, 1.442695
        %v1146 = vpow.pop %v1145
        %v1147 = vsel %vm938, %v1132, 0.0
        %1148 = vadd.xlane.f32.xlu0 %v1147
        %v1149 = vpop.xlane.xlu0 %1148
        %v1150 = vsel %vm938, %v1134, 0.0
        %1151 = vadd.xlane.f32.xlu0 %v1150
        %v1152 = vpop.xlane.xlu0 %1151
        %v1153 = vsel %vm938, %v1136, 0.0
        %1154 = vadd.xlane.f32.xlu0 %v1153
        %v1155 = vpop.xlane.xlu0 %1154
        %v1156 = vsel %vm938, %v1138, 0.0
        %1157 = vadd.xlane.f32.xlu0 %v1156
        %v1158 = vpop.xlane.xlu0 %1157
        %v1159 = vsel %vm938, %v1140, 0.0
        %1160 = vadd.xlane.f32.xlu0 %v1159
        %v1161 = vpop.xlane.xlu0 %1160
        %v1162 = vsel %vm938, %v1142, 0.0
        %1163 = vadd.xlane.f32.xlu0 %v1162
        %v1164 = vpop.xlane.xlu0 %1163
        %v1165 = vsel %vm938, %v1144, 0.0
        %1166 = vadd.xlane.f32.xlu0 %v1165
        %v1167 = vpop.xlane.xlu0 %1166
        %v1168 = vsel %vm938, %v1146, 0.0
        %1169 = vadd.xlane.f32.xlu0 %v1168
        %v1170 = vpop.xlane.xlu0 %1169
        %v1171 = vrcp.pop %v1149
        %v1172 = vrcp.pop %v1152
        %v1173 = vrcp.pop %v1155
        %v1174 = vrcp.pop %v1158
        %v1175 = vrcp.pop %v1161
        %v1176 = vrcp.pop %v1164
        %v1177 = vrcp.pop %v1167
        %v1178 = vrcp.pop %v1170
        %v1179 = vmul.f32 %v1132, %v1171
        %v1180 = vmul.f32 %v1134, %v1172
        %v1181 = vmul.f32 %v1136, %v1173
        %v1182 = vmul.f32 %v1138, %v1174
        %v1183 = vmul.f32 %v1140, %v1175
        %v1184 = vmul.f32 %v1142, %v1176
        %v1185 = vmul.f32 %v1144, %v1177
        %v1186 = vmul.f32 %v1146, %v1178
        %v1187 = vpack.c.bf16 %v1180, %v1179
        %v1188 = vpack.c.bf16 %v1182, %v1181
        %v1189 = vpack.c.bf16 %v1184, %v1183
        %v1190 = vpack.c.bf16 %v1186, %v1185
        %v1191 = vmul.f32 %v1031, %v1057
        %v1192 = vmul.f32 %v1032, %v1057
        %v1193 = vmul.f32 %v1033, %v1057
        %v1194 = vmul.f32 %v1034, %v1057
        %v1195 = vmul.f32 %v1035, %v1057
        %v1196 = vmul.f32 %v1036, %v1057
        %v1197 = vmul.f32 %v1037, %v1057
        %v1198 = vmul.f32 %v1038, %v1057
        %v1199 = vpack.c.bf16 %v1192, %v1191
        %v1200 = vpack.c.bf16 %v1194, %v1193
        %v1201 = vpack.c.bf16 %v1196, %v1195
        %v1202 = vpack.c.bf16 %v1198, %v1197
        %v1204 = vsel %vm938, %v1187, 0
        %v1207 = vsel %vm938, %v1188, 0
        %v1210 = vsel %vm938, %v1189, 0
        %v1213 = vsel %vm938, %v1190, 0
        %1215 = vmatpush.bf16.msra.mxu0 0
        %1216 = vmatpush.bf16.msra.mxu0 0
        %1217 = vmatpush.bf16.msra.mxu0 0
        %1218 = vmatpush.bf16.msra.mxu0 0
        %1219 = vmatpush.bf16.msra.mxu0 %v1202
        %1220 = vmatpush.bf16.msra.mxu0 %v1201
        %1221 = vmatpush.bf16.msra.mxu0 %v1200
        %1222 = vmatpush.bf16.msra.mxu0 %v1199
        %1223 = vmatmul.bf16.gmra.mxu0 %v1204
        %v1224 = vpop.f32.mrf.mxu0
        %v1225 = vadd.f32 0.0, %v1224
        %v1226 = vpop.f32.mrf.mxu0
        %v1227 = vadd.f32 0.0, %v1226
        %1228 = vmatmul.bf16.gmra.mxu0 %v1207
        %v1229 = vpop.f32.mrf.mxu0
        %v1230 = vadd.f32 0.0, %v1229
        %v1231 = vpop.f32.mrf.mxu0
        %v1232 = vadd.f32 0.0, %v1231
        %1233 = vmatmul.bf16.gmra.mxu0 %v1210
        %v1234 = vpop.f32.mrf.mxu0
        %v1235 = vadd.f32 0.0, %v1234
        %v1236 = vpop.f32.mrf.mxu0
        %v1237 = vadd.f32 0.0, %v1236
        %1238 = vmatmul.bf16.gmra.mxu0 %v1213
        %v1239 = vpop.f32.mrf.mxu0
        %v1240 = vadd.f32 0.0, %v1239
        %v1241 = vpop.f32.mrf.mxu0
        %v1242 = vadd.f32 0.0, %v1241
        %1243 = vdwg.mxu0
        %v1245 = vsel %vm938, %v1027, 0
        %v1248 = vsel %vm938, %v1028, 0
        %v1251 = vsel %vm938, %v1029, 0
        %v1254 = vsel %vm938, %v1030, 0
        %1256 = vmatpush.bf16.msra.mxu0 0
        %1257 = vmatpush.bf16.msra.mxu0 0
        %1258 = vmatpush.bf16.msra.mxu0 0
        %1259 = vmatpush.bf16.msra.mxu0 0
        %1260 = vmatpush.bf16.msra.mxu0 %v1050
        %1261 = vmatpush.bf16.msra.mxu0 %v1049
        %1262 = vmatpush.bf16.msra.mxu0 %v1048
        %1263 = vmatpush.bf16.msra.mxu0 %v1047
        %1264 = vmatmul.bf16.gmra.mxu0 %v1245
        %v1265 = vpop.f32.mrf.mxu0
        %v1266 = vadd.f32 %v1225, %v1265
        %v1267 = vpop.f32.mrf.mxu0
        %v1268 = vadd.f32 %v1227, %v1267
        %1269 = vmatmul.bf16.gmra.mxu0 %v1248
        %v1270 = vpop.f32.mrf.mxu0
        %v1271 = vadd.f32 %v1230, %v1270
        %v1272 = vpop.f32.mrf.mxu0
        %v1273 = vadd.f32 %v1232, %v1272
        %1274 = vmatmul.bf16.gmra.mxu0 %v1251
        %v1275 = vpop.f32.mrf.mxu0
        %v1276 = vadd.f32 %v1235, %v1275
        %v1277 = vpop.f32.mrf.mxu0
        %v1278 = vadd.f32 %v1237, %v1277
        %1279 = vmatmul.bf16.gmra.mxu0 %v1254
        %v1280 = vpop.f32.mrf.mxu0
        %v1281 = vadd.f32 %v1240, %v1280
        %v1282 = vpop.f32.mrf.mxu0
        %v1283 = vadd.f32 %v1242, %v1282
        %1284 = vdwg.mxu0
        %s1285 = scalar_lea.vmem %s7, 2
        %v1286 = vld [vmem:[%s1285] sm:$0x1]
        %v1288 = vpack.i.b16 %v1286, %v1286
        %v1290 = vperm.slane %v1288, 0
        %v1291 = vunpack.c.l.bf16 %v1290
        %v1292 = vmul.f32 %v888, %v1291
        %v1293 = vmul.f32 %v889, %v1291
        %v1294 = vmul.f32 %v890, %v1291
        %v1295 = vmul.f32 %v891, %v1291
        %v1296 = vmul.f32 %v892, %v1291
        %v1297 = vmul.f32 %v893, %v1291
        %v1298 = vmul.f32 %v894, %v1291
        %v1299 = vmul.f32 %v895, %v1291
        %v1300 = vpack.c.bf16 %v1293, %v1292
        %v1301 = vpack.c.bf16 %v1295, %v1294
        %v1302 = vpack.c.bf16 %v1297, %v1296
        %v1303 = vpack.c.bf16 %v1299, %v1298
        %1304 = vmatpush.bf16.xpose.msra.mxu0 0
        %1305 = vmatpush.bf16.xpose.msra.mxu0 0
        %1306 = vmatpush.bf16.xpose.msra.mxu0 0
        %1307 = vmatpush.bf16.xpose.msra.mxu0 0
        %1308 = vmatpush.bf16.xpose.msra.mxu0 %v866
        %1309 = vmatpush.bf16.xpose.msra.mxu0 %v865
        %1310 = vmatpush.bf16.xpose.msra.mxu0 %v864
        %1311 = vmatpush.bf16.xpose.msra.mxu0 %v863
        %1312 = vmatmul.bf16.gmra.mxu0 %v1300
        %v1313 = vpop.f32.mrf.mxu0
        %v1314 = vadd.f32 %v875, %v1313
        %v1315 = vpop.f32.mrf.mxu0
        %v1316 = vadd.f32 %v876, %v1315
        %1317 = vmatmul.bf16.gmra.mxu0 %v1301
        %v1318 = vpop.f32.mrf.mxu0
        %v1319 = vadd.f32 %v877, %v1318
        %v1320 = vpop.f32.mrf.mxu0
        %v1321 = vadd.f32 %v878, %v1320
        %1322 = vmatmul.bf16.gmra.mxu0 %v1302
        %v1323 = vpop.f32.mrf.mxu0
        %v1324 = vadd.f32 %v879, %v1323
        %v1325 = vpop.f32.mrf.mxu0
        %v1326 = vadd.f32 %v880, %v1325
        %1327 = vmatmul.bf16.gmra.mxu0 %v1303
        %v1328 = vpop.f32.mrf.mxu0
        %v1329 = vadd.f32 %v881, %v1328
        %v1330 = vpop.f32.mrf.mxu0
        %v1331 = vadd.f32 %v882, %v1330
        %1332 = vdwg.mxu0
        %v1333 = vsel %vm938, %v1314, -inf
        %1334 = vmax.xlane.f32.xlu0 %v1333
        %v1335 = vpop.xlane.xlu0 %1334
        %v1336 = vsel %vm938, %v1316, -inf
        %1337 = vmax.xlane.f32.xlu0 %v1336
        %v1338 = vpop.xlane.xlu0 %1337
        %v1339 = vsel %vm938, %v1319, -inf
        %1340 = vmax.xlane.f32.xlu0 %v1339
        %v1341 = vpop.xlane.xlu0 %1340
        %v1342 = vsel %vm938, %v1321, -inf
        %1343 = vmax.xlane.f32.xlu0 %v1342
        %v1344 = vpop.xlane.xlu0 %1343
        %v1345 = vsel %vm938, %v1324, -inf
        %1346 = vmax.xlane.f32.xlu0 %v1345
        %v1347 = vpop.xlane.xlu0 %1346
        %v1348 = vsel %vm938, %v1326, -inf
        %1349 = vmax.xlane.f32.xlu0 %v1348
        %v1350 = vpop.xlane.xlu0 %1349
        %v1351 = vsel %vm938, %v1329, -inf
        %1352 = vmax.xlane.f32.xlu0 %v1351
        %v1353 = vpop.xlane.xlu0 %1352
        %v1354 = vsel %vm938, %v1331, -inf
        %1355 = vmax.xlane.f32.xlu0 %v1354
        %v1356 = vpop.xlane.xlu0 %1355
        %v1357 = vsub.f32 %v1314, %v1335
        %v1358 = vsub.f32 %v1316, %v1338
        %v1359 = vsub.f32 %v1319, %v1341
        %v1360 = vsub.f32 %v1321, %v1344
        %v1361 = vsub.f32 %v1324, %v1347
        %v1362 = vsub.f32 %v1326, %v1350
        %v1363 = vsub.f32 %v1329, %v1353
        %v1364 = vsub.f32 %v1331, %v1356
        %v1365 = vmul.f32 %v1357, 1.442695
        %v1366 = vpow.pop %v1365
        %v1367 = vmul.f32 %v1358, 1.442695
        %v1368 = vpow.pop %v1367
        %v1369 = vmul.f32 %v1359, 1.442695
        %v1370 = vpow.pop %v1369
        %v1371 = vmul.f32 %v1360, 1.442695
        %v1372 = vpow.pop %v1371
        %v1373 = vmul.f32 %v1361, 1.442695
        %v1374 = vpow.pop %v1373
        %v1375 = vmul.f32 %v1362, 1.442695
        %v1376 = vpow.pop %v1375
        %v1377 = vmul.f32 %v1363, 1.442695
        %v1378 = vpow.pop %v1377
        %v1379 = vmul.f32 %v1364, 1.442695
        %v1380 = vpow.pop %v1379
        %v1381 = vsel %vm938, %v1366, 0.0
        %1382 = vadd.xlane.f32.xlu0 %v1381
        %v1383 = vpop.xlane.xlu0 %1382
        %v1384 = vsel %vm938, %v1368, 0.0
        %1385 = vadd.xlane.f32.xlu0 %v1384
        %v1386 = vpop.xlane.xlu0 %1385
        %v1387 = vsel %vm938, %v1370, 0.0
        %1388 = vadd.xlane.f32.xlu0 %v1387
        %v1389 = vpop.xlane.xlu0 %1388
        %v1390 = vsel %vm938, %v1372, 0.0
        %1391 = vadd.xlane.f32.xlu0 %v1390
        %v1392 = vpop.xlane.xlu0 %1391
        %v1393 = vsel %vm938, %v1374, 0.0
        %1394 = vadd.xlane.f32.xlu0 %v1393
        %v1395 = vpop.xlane.xlu0 %1394
        %v1396 = vsel %vm938, %v1376, 0.0
        %1397 = vadd.xlane.f32.xlu0 %v1396
        %v1398 = vpop.xlane.xlu0 %1397
        %v1399 = vsel %vm938, %v1378, 0.0
        %1400 = vadd.xlane.f32.xlu0 %v1399
        %v1401 = vpop.xlane.xlu0 %1400
        %v1402 = vsel %vm938, %v1380, 0.0
        %1403 = vadd.xlane.f32.xlu0 %v1402
        %v1404 = vpop.xlane.xlu0 %1403
        %v1405 = vrcp.pop %v1383
        %v1406 = vrcp.pop %v1386
        %v1407 = vrcp.pop %v1389
        %v1408 = vrcp.pop %v1392
        %v1409 = vrcp.pop %v1395
        %v1410 = vrcp.pop %v1398
        %v1411 = vrcp.pop %v1401
        %v1412 = vrcp.pop %v1404
        %v1413 = vmul.f32 %v1366, %v1405
        %v1414 = vmul.f32 %v1368, %v1406
        %v1415 = vmul.f32 %v1370, %v1407
        %v1416 = vmul.f32 %v1372, %v1408
        %v1417 = vmul.f32 %v1374, %v1409
        %v1418 = vmul.f32 %v1376, %v1410
        %v1419 = vmul.f32 %v1378, %v1411
        %v1420 = vmul.f32 %v1380, %v1412
        %v1421 = vpack.c.bf16 %v1414, %v1413
        %v1422 = vpack.c.bf16 %v1416, %v1415
        %v1423 = vpack.c.bf16 %v1418, %v1417
        %v1424 = vpack.c.bf16 %v1420, %v1419
        %v1425 = vmul.f32 %v1031, %v1291
        %v1426 = vmul.f32 %v1032, %v1291
        %v1427 = vmul.f32 %v1033, %v1291
        %v1428 = vmul.f32 %v1034, %v1291
        %v1429 = vmul.f32 %v1035, %v1291
        %v1430 = vmul.f32 %v1036, %v1291
        %v1431 = vmul.f32 %v1037, %v1291
        %v1432 = vmul.f32 %v1038, %v1291
        %v1433 = vpack.c.bf16 %v1426, %v1425
        %v1434 = vpack.c.bf16 %v1428, %v1427
        %v1435 = vpack.c.bf16 %v1430, %v1429
        %v1436 = vpack.c.bf16 %v1432, %v1431
        %v1438 = vsel %vm938, %v1421, 0
        %v1441 = vsel %vm938, %v1422, 0
        %v1444 = vsel %vm938, %v1423, 0
        %v1447 = vsel %vm938, %v1424, 0
        %1449 = vmatpush.bf16.msra.mxu0 0
        %1450 = vmatpush.bf16.msra.mxu0 0
        %1451 = vmatpush.bf16.msra.mxu0 0
        %1452 = vmatpush.bf16.msra.mxu0 0
        %1453 = vmatpush.bf16.msra.mxu0 %v1436
        %1454 = vmatpush.bf16.msra.mxu0 %v1435
        %1455 = vmatpush.bf16.msra.mxu0 %v1434
        %1456 = vmatpush.bf16.msra.mxu0 %v1433
        %1457 = vmatmul.bf16.gmra.mxu0 %v1438
        %v1458 = vpop.f32.mrf.mxu0
        %v1459 = vadd.f32 0.0, %v1458
        %v1460 = vpop.f32.mrf.mxu0
        %v1461 = vadd.f32 0.0, %v1460
        %1462 = vmatmul.bf16.gmra.mxu0 %v1441
        %v1463 = vpop.f32.mrf.mxu0
        %v1464 = vadd.f32 0.0, %v1463
        %v1465 = vpop.f32.mrf.mxu0
        %v1466 = vadd.f32 0.0, %v1465
        %1467 = vmatmul.bf16.gmra.mxu0 %v1444
        %v1468 = vpop.f32.mrf.mxu0
        %v1469 = vadd.f32 0.0, %v1468
        %v1470 = vpop.f32.mrf.mxu0
        %v1471 = vadd.f32 0.0, %v1470
        %1472 = vmatmul.bf16.gmra.mxu0 %v1447
        %v1473 = vpop.f32.mrf.mxu0
        %v1474 = vadd.f32 0.0, %v1473
        %v1475 = vpop.f32.mrf.mxu0
        %v1476 = vadd.f32 0.0, %v1475
        %1477 = vdwg.mxu0
        %v1478 = vadd.f32 %v1266, %v1459
        %v1479 = vadd.f32 %v1268, %v1461
        %v1480 = vadd.f32 %v1271, %v1464
        %v1481 = vadd.f32 %v1273, %v1466
        %v1482 = vadd.f32 %v1276, %v1469
        %v1483 = vadd.f32 %v1278, %v1471
        %v1484 = vadd.f32 %v1281, %v1474
        %v1485 = vadd.f32 %v1283, %v1476
        %s1486 = scalar_lea.vmem %s7, 3
        %v1487 = vld [vmem:[%s1486] sm:$0x1]
        %v1489 = vpack.i.b16 %v1487, %v1487
        %v1491 = vperm.slane %v1489, 0
        %v1492 = vunpack.c.l.bf16 %v1491
        %v1493 = vmul.f32 %v888, %v1492
        %v1494 = vmul.f32 %v889, %v1492
        %v1495 = vmul.f32 %v890, %v1492
        %v1496 = vmul.f32 %v891, %v1492
        %v1497 = vmul.f32 %v892, %v1492
        %v1498 = vmul.f32 %v893, %v1492
        %v1499 = vmul.f32 %v894, %v1492
        %v1500 = vmul.f32 %v895, %v1492
        %v1501 = vpack.c.bf16 %v1494, %v1493
        %v1502 = vpack.c.bf16 %v1496, %v1495
        %v1503 = vpack.c.bf16 %v1498, %v1497
        %v1504 = vpack.c.bf16 %v1500, %v1499
        %1505 = vmatpush.bf16.xpose.msra.mxu0 0
        %1506 = vmatpush.bf16.xpose.msra.mxu0 0
        %1507 = vmatpush.bf16.xpose.msra.mxu0 0
        %1508 = vmatpush.bf16.xpose.msra.mxu0 0
        %1509 = vmatpush.bf16.xpose.msra.mxu0 %v866
        %1510 = vmatpush.bf16.xpose.msra.mxu0 %v865
        %1511 = vmatpush.bf16.xpose.msra.mxu0 %v864
        %1512 = vmatpush.bf16.xpose.msra.mxu0 %v863
        %1513 = vmatmul.bf16.gmra.mxu0 %v1501
        %v1514 = vpop.f32.mrf.mxu0
        %v1515 = vadd.f32 %v875, %v1514
        %v1516 = vpop.f32.mrf.mxu0
        %v1517 = vadd.f32 %v876, %v1516
        %1518 = vmatmul.bf16.gmra.mxu0 %v1502
        %v1519 = vpop.f32.mrf.mxu0
        %v1520 = vadd.f32 %v877, %v1519
        %v1521 = vpop.f32.mrf.mxu0
        %v1522 = vadd.f32 %v878, %v1521
        %1523 = vmatmul.bf16.gmra.mxu0 %v1503
        %v1524 = vpop.f32.mrf.mxu0
        %v1525 = vadd.f32 %v879, %v1524
        %v1526 = vpop.f32.mrf.mxu0
        %v1527 = vadd.f32 %v880, %v1526
        %1528 = vmatmul.bf16.gmra.mxu0 %v1504
        %v1529 = vpop.f32.mrf.mxu0
        %v1530 = vadd.f32 %v881, %v1529
        %v1531 = vpop.f32.mrf.mxu0
        %v1532 = vadd.f32 %v882, %v1531
        %1533 = vdwg.mxu0
        %v1534 = vsel %vm938, %v1515, -inf
        %1535 = vmax.xlane.f32.xlu0 %v1534
        %v1536 = vpop.xlane.xlu0 %1535
        %v1537 = vsel %vm938, %v1517, -inf
        %1538 = vmax.xlane.f32.xlu0 %v1537
        %v1539 = vpop.xlane.xlu0 %1538
        %v1540 = vsel %vm938, %v1520, -inf
        %1541 = vmax.xlane.f32.xlu0 %v1540
        %v1542 = vpop.xlane.xlu0 %1541
        %v1543 = vsel %vm938, %v1522, -inf
        %1544 = vmax.xlane.f32.xlu0 %v1543
        %v1545 = vpop.xlane.xlu0 %1544
        %v1546 = vsel %vm938, %v1525, -inf
        %1547 = vmax.xlane.f32.xlu0 %v1546
        %v1548 = vpop.xlane.xlu0 %1547
        %v1549 = vsel %vm938, %v1527, -inf
        %1550 = vmax.xlane.f32.xlu0 %v1549
        %v1551 = vpop.xlane.xlu0 %1550
        %v1552 = vsel %vm938, %v1530, -inf
        %1553 = vmax.xlane.f32.xlu0 %v1552
        %v1554 = vpop.xlane.xlu0 %1553
        %v1555 = vsel %vm938, %v1532, -inf
        %1556 = vmax.xlane.f32.xlu0 %v1555
        %v1557 = vpop.xlane.xlu0 %1556
        %v1558 = vsub.f32 %v1515, %v1536
        %v1559 = vsub.f32 %v1517, %v1539
        %v1560 = vsub.f32 %v1520, %v1542
        %v1561 = vsub.f32 %v1522, %v1545
        %v1562 = vsub.f32 %v1525, %v1548
        %v1563 = vsub.f32 %v1527, %v1551
        %v1564 = vsub.f32 %v1530, %v1554
        %v1565 = vsub.f32 %v1532, %v1557
        %v1566 = vmul.f32 %v1558, 1.442695
        %v1567 = vpow.pop %v1566
        %v1568 = vmul.f32 %v1559, 1.442695
        %v1569 = vpow.pop %v1568
        %v1570 = vmul.f32 %v1560, 1.442695
        %v1571 = vpow.pop %v1570
        %v1572 = vmul.f32 %v1561, 1.442695
        %v1573 = vpow.pop %v1572
        %v1574 = vmul.f32 %v1562, 1.442695
        %v1575 = vpow.pop %v1574
        %v1576 = vmul.f32 %v1563, 1.442695
        %v1577 = vpow.pop %v1576
        %v1578 = vmul.f32 %v1564, 1.442695
        %v1579 = vpow.pop %v1578
        %v1580 = vmul.f32 %v1565, 1.442695
        %v1581 = vpow.pop %v1580
        %v1582 = vsel %vm938, %v1567, 0.0
        %1583 = vadd.xlane.f32.xlu0 %v1582
        %v1584 = vpop.xlane.xlu0 %1583
        %v1585 = vsel %vm938, %v1569, 0.0
        %1586 = vadd.xlane.f32.xlu0 %v1585
        %v1587 = vpop.xlane.xlu0 %1586
        %v1588 = vsel %vm938, %v1571, 0.0
        %1589 = vadd.xlane.f32.xlu0 %v1588
        %v1590 = vpop.xlane.xlu0 %1589
        %v1591 = vsel %vm938, %v1573, 0.0
        %1592 = vadd.xlane.f32.xlu0 %v1591
        %v1593 = vpop.xlane.xlu0 %1592
        %v1594 = vsel %vm938, %v1575, 0.0
        %1595 = vadd.xlane.f32.xlu0 %v1594
        %v1596 = vpop.xlane.xlu0 %1595
        %v1597 = vsel %vm938, %v1577, 0.0
        %1598 = vadd.xlane.f32.xlu0 %v1597
        %v1599 = vpop.xlane.xlu0 %1598
        %v1600 = vsel %vm938, %v1579, 0.0
        %1601 = vadd.xlane.f32.xlu0 %v1600
        %v1602 = vpop.xlane.xlu0 %1601
        %v1603 = vsel %vm938, %v1581, 0.0
        %1604 = vadd.xlane.f32.xlu0 %v1603
        %v1605 = vpop.xlane.xlu0 %1604
        %v1606 = vrcp.pop %v1584
        %v1607 = vrcp.pop %v1587
        %v1608 = vrcp.pop %v1590
        %v1609 = vrcp.pop %v1593
        %v1610 = vrcp.pop %v1596
        %v1611 = vrcp.pop %v1599
        %v1612 = vrcp.pop %v1602
        %v1613 = vrcp.pop %v1605
        %v1614 = vmul.f32 %v1567, %v1606
        %v1615 = vmul.f32 %v1569, %v1607
        %v1616 = vmul.f32 %v1571, %v1608
        %v1617 = vmul.f32 %v1573, %v1609
        %v1618 = vmul.f32 %v1575, %v1610
        %v1619 = vmul.f32 %v1577, %v1611
        %v1620 = vmul.f32 %v1579, %v1612
        %v1621 = vmul.f32 %v1581, %v1613
        %v1622 = vpack.c.bf16 %v1615, %v1614
        %v1623 = vpack.c.bf16 %v1617, %v1616
        %v1624 = vpack.c.bf16 %v1619, %v1618
        %v1625 = vpack.c.bf16 %v1621, %v1620
        %v1626 = vmul.f32 %v1031, %v1492
        %v1627 = vmul.f32 %v1032, %v1492
        %v1628 = vmul.f32 %v1033, %v1492
        %v1629 = vmul.f32 %v1034, %v1492
        %v1630 = vmul.f32 %v1035, %v1492
        %v1631 = vmul.f32 %v1036, %v1492
        %v1632 = vmul.f32 %v1037, %v1492
        %v1633 = vmul.f32 %v1038, %v1492
        %v1634 = vpack.c.bf16 %v1627, %v1626
        %v1635 = vpack.c.bf16 %v1629, %v1628
        %v1636 = vpack.c.bf16 %v1631, %v1630
        %v1637 = vpack.c.bf16 %v1633, %v1632
        %v1639 = vsel %vm938, %v1622, 0
        %v1642 = vsel %vm938, %v1623, 0
        %v1645 = vsel %vm938, %v1624, 0
        %v1648 = vsel %vm938, %v1625, 0
        %1650 = vmatpush.bf16.msra.mxu0 0
        %1651 = vmatpush.bf16.msra.mxu0 0
        %1652 = vmatpush.bf16.msra.mxu0 0
        %1653 = vmatpush.bf16.msra.mxu0 0
        %1654 = vmatpush.bf16.msra.mxu0 %v1637
        %1655 = vmatpush.bf16.msra.mxu0 %v1636
        %1656 = vmatpush.bf16.msra.mxu0 %v1635
        %1657 = vmatpush.bf16.msra.mxu0 %v1634
        %1658 = vmatmul.bf16.gmra.mxu0 %v1639
        %v1659 = vpop.f32.mrf.mxu0
        %v1660 = vadd.f32 0.0, %v1659
        %v1661 = vpop.f32.mrf.mxu0
        %v1662 = vadd.f32 0.0, %v1661
        %1663 = vmatmul.bf16.gmra.mxu0 %v1642
        %v1664 = vpop.f32.mrf.mxu0
        %v1665 = vadd.f32 0.0, %v1664
        %v1666 = vpop.f32.mrf.mxu0
        %v1667 = vadd.f32 0.0, %v1666
        %1668 = vmatmul.bf16.gmra.mxu0 %v1645
        %v1669 = vpop.f32.mrf.mxu0
        %v1670 = vadd.f32 0.0, %v1669
        %v1671 = vpop.f32.mrf.mxu0
        %v1672 = vadd.f32 0.0, %v1671
        %1673 = vmatmul.bf16.gmra.mxu0 %v1648
        %v1674 = vpop.f32.mrf.mxu0
        %v1675 = vadd.f32 0.0, %v1674
        %v1676 = vpop.f32.mrf.mxu0
        %v1677 = vadd.f32 0.0, %v1676
        %1678 = vdwg.mxu0
        %v1679 = vadd.f32 %v1478, %v1660
        %v1680 = vadd.f32 %v1479, %v1662
        %v1681 = vadd.f32 %v1480, %v1665
        %v1682 = vadd.f32 %v1481, %v1667
        %v1683 = vadd.f32 %v1482, %v1670
        %v1684 = vadd.f32 %v1483, %v1672
        %v1685 = vadd.f32 %v1484, %v1675
        %v1686 = vadd.f32 %v1485, %v1677
        %v1687 = vpack.c.bf16 %v1680, %v1679
        %v1688 = vpack.c.bf16 %v1682, %v1681
        %v1689 = vpack.c.bf16 %v1684, %v1683
        %v1690 = vpack.c.bf16 %v1686, %v1685
        %v1691 = vld [vmem:[#allocation7] sm:$0xf]
        %v1692 = vld [vmem:[#allocation7 + $0x4] sm:$0xf]
        %v1693 = vld [vmem:[#allocation7 + $0x8] sm:$0xf]
        %v1694 = vld [vmem:[#allocation7 + $0xc] sm:$0xf]
        %v1695 = vld [vmem:[#allocation7 + $0x10] sm:$0xf]
        %v1696 = vld [vmem:[#allocation7 + $0x14] sm:$0xf]
        %v1697 = vld [vmem:[#allocation7 + $0x18] sm:$0xf]
        %v1698 = vld [vmem:[#allocation7 + $0x1c] sm:$0xf]
        %v1699 = vld [vmem:[#allocation7 + $0x20] sm:$0xf]
        %v1700 = vld [vmem:[#allocation7 + $0x24] sm:$0xf]
        %v1701 = vld [vmem:[#allocation7 + $0x28] sm:$0xf]
        %v1702 = vld [vmem:[#allocation7 + $0x2c] sm:$0xf]
        %v1703 = vld [vmem:[#allocation7 + $0x30] sm:$0xf]
        %v1704 = vld [vmem:[#allocation7 + $0x34] sm:$0xf]
        %v1705 = vld [vmem:[#allocation7 + $0x38] sm:$0xf]
        %v1706 = vld [vmem:[#allocation7 + $0x3c] sm:$0xf]
        %v1723 = vunpack.c.l.b16 %v1691
        %v1724 = vunpack.c.l.b16 %v1692
        %v1725 = vunpack.c.l.b16 %v1693
        %v1726 = vunpack.c.l.b16 %v1694
        %v1727 = vunpack.c.l.b16 %v1695
        %v1728 = vunpack.c.l.b16 %v1696
        %v1729 = vunpack.c.l.b16 %v1697
        %v1730 = vunpack.c.l.b16 %v1698
        %v1731 = vunpack.c.l.b16 %v1699
        %v1732 = vunpack.c.l.b16 %v1700
        %v1733 = vunpack.c.l.b16 %v1701
        %v1734 = vunpack.c.l.b16 %v1702
        %v1735 = vunpack.c.l.b16 %v1703
        %v1736 = vunpack.c.l.b16 %v1704
        %v1737 = vunpack.c.l.b16 %v1705
        %v1738 = vunpack.c.l.b16 %v1706
        %v1739 = vpack.c.b16 %v1724, %v1723
        %v1740 = vpack.c.b16 %v1726, %v1725
        %v1741 = vpack.c.b16 %v1728, %v1727
        %v1742 = vpack.c.b16 %v1730, %v1729
        %v1743 = vpack.c.b16 %v1732, %v1731
        %v1744 = vpack.c.b16 %v1734, %v1733
        %v1745 = vpack.c.b16 %v1736, %v1735
        %v1746 = vpack.c.b16 %v1738, %v1737
        %1755 = vmatpush.bf16.msra.mxu0 %v1746
        %1756 = vmatpush.bf16.msra.mxu0 %v1745
        %1757 = vmatpush.bf16.msra.mxu0 %v1744
        %1758 = vmatpush.bf16.msra.mxu0 %v1743
        %1759 = vmatpush.bf16.msra.mxu0 %v1742
        %1760 = vmatpush.bf16.msra.mxu0 %v1741
        %1761 = vmatpush.bf16.msra.mxu0 %v1740
        %1762 = vmatpush.bf16.msra.mxu0 %v1739
        %1763 = vmatmul.bf16.gmra.mxu0 %v1687
        %v1764 = vpop.f32.mrf.mxu0
        %v1765 = vadd.f32 0.0, %v1764
        %v1766 = vpop.f32.mrf.mxu0
        %v1767 = vadd.f32 0.0, %v1766
        %1768 = vmatmul.bf16.gmra.mxu0 %v1688
        %v1769 = vpop.f32.mrf.mxu0
        %v1770 = vadd.f32 0.0, %v1769
        %v1771 = vpop.f32.mrf.mxu0
        %v1772 = vadd.f32 0.0, %v1771
        %1773 = vmatmul.bf16.gmra.mxu0 %v1689
        %v1774 = vpop.f32.mrf.mxu0
        %v1775 = vadd.f32 0.0, %v1774
        %v1776 = vpop.f32.mrf.mxu0
        %v1777 = vadd.f32 0.0, %v1776
        %1778 = vmatmul.bf16.gmra.mxu0 %v1690
        %v1779 = vpop.f32.mrf.mxu0
        %v1780 = vadd.f32 0.0, %v1779
        %v1781 = vpop.f32.mrf.mxu0
        %v1782 = vadd.f32 0.0, %v1781
        %1783 = vdwg.mxu0
        %v1784 = vld [vmem:[%s456] sm:$0xf]
        %v1785 = vld [vmem:[%s456 + $0x4] sm:$0xf]
        %v1786 = vld [vmem:[%s456 + $0x8] sm:$0xf]
        %v1787 = vld [vmem:[%s456 + $0xc] sm:$0xf]
        %v1788 = vld [vmem:[%s456 + $0x10] sm:$0xf]
        %v1789 = vld [vmem:[%s456 + $0x14] sm:$0xf]
        %v1790 = vld [vmem:[%s456 + $0x18] sm:$0xf]
        %v1791 = vld [vmem:[%s456 + $0x1c] sm:$0xf]
        %v1792 = vpack.c.bf16 %v1767, %v1765
        %v1793 = vpack.c.bf16 %v1772, %v1770
        %v1794 = vpack.c.bf16 %v1777, %v1775
        %v1795 = vpack.c.bf16 %v1782, %v1780
        %v1796 = vld [vmem:[%s9] sm:$0x1]
        %v1798 = vperm.slane %v1796, 0
        %v1808 = vunpack.c.l.b16 %v1784
        %v1809 = vunpack.c.l.b16 %v1785
        %v1810 = vunpack.c.l.b16 %v1786
        %v1811 = vunpack.c.l.b16 %v1787
        %v1812 = vunpack.c.l.b16 %v1788
        %v1813 = vunpack.c.l.b16 %v1789
        %v1814 = vunpack.c.l.b16 %v1790
        %v1815 = vunpack.c.l.b16 %v1791
        %v1816 = vpack.c.b16 %v1809, %v1808
        %v1817 = vpack.c.b16 %v1811, %v1810
        %v1818 = vpack.c.b16 %v1813, %v1812
        %v1819 = vpack.c.b16 %v1815, %v1814
        %v1821 = vsel %vm938, %v1816, 0
        %v1824 = vsel %vm938, %v1817, 0
        %v1827 = vsel %vm938, %v1818, 0
        %v1830 = vsel %vm938, %v1819, 0
        %1832 = vmatpush.bf16.msra.mxu0 0
        %1833 = vmatpush.bf16.msra.mxu0 0
        %1834 = vmatpush.bf16.msra.mxu0 0
        %1835 = vmatpush.bf16.msra.mxu0 0
        %1836 = vmatpush.bf16.msra.mxu0 %v1795
        %1837 = vmatpush.bf16.msra.mxu0 %v1794
        %1838 = vmatpush.bf16.msra.mxu0 %v1793
        %1839 = vmatpush.bf16.msra.mxu0 %v1792
        %1840 = vmatmul.bf16.gmra.mxu0 %v1821
        %v1841 = vpop.f32.mrf.mxu0
        %v1842 = vadd.f32 %v1798, %v1841
        %v1843 = vpop.f32.mrf.mxu0
        %v1844 = vadd.f32 %v1798, %v1843
        %1845 = vmatmul.bf16.gmra.mxu0 %v1824
        %v1846 = vpop.f32.mrf.mxu0
        %v1847 = vadd.f32 %v1798, %v1846
        %v1848 = vpop.f32.mrf.mxu0
        %v1849 = vadd.f32 %v1798, %v1848
        %1850 = vmatmul.bf16.gmra.mxu0 %v1827
        %v1851 = vpop.f32.mrf.mxu0
        %v1852 = vadd.f32 %v1798, %v1851
        %v1853 = vpop.f32.mrf.mxu0
        %v1854 = vadd.f32 %v1798, %v1853
        %1855 = vmatmul.bf16.gmra.mxu0 %v1830
        %v1856 = vpop.f32.mrf.mxu0
        %v1857 = vadd.f32 %v1798, %v1856
        %v1858 = vpop.f32.mrf.mxu0
        %v1859 = vadd.f32 %v1798, %v1858
        %1860 = vdwg.mxu0
        %1861 = vst [vmem:[%s444] sm:$0xff] %v1842
        %1862 = vst [vmem:[%s444 + $0x8] sm:$0xff] %v1844
        %1863 = vst [vmem:[%s444 + $0x10] sm:$0xff] %v1847
        %1864 = vst [vmem:[%s444 + $0x18] sm:$0xff] %v1849
        %1865 = vst [vmem:[%s444 + $0x20] sm:$0xff] %v1852
        %1866 = vst [vmem:[%s444 + $0x28] sm:$0xff] %v1854
        %1867 = vst [vmem:[%s444 + $0x30] sm:$0xff] %v1857
        %1868 = vst [vmem:[%s444 + $0x38] sm:$0xff] %v1859
        %s1869 = sand.u32 %s261, 1
        %s1870 = scalar_lea.sflag [#allocation4], %s1869
        %s1871 = sand.u32 %s261, 1
        %s1872 = smul.addr %s1871, 64
        %s1873 = scalar_lea.vmem [#allocation8], %s1872
        // Predicated region
        $region73: #{tpu_custom_call.1} parent=59 // pred_check
          %p1874 = pneg %p271
        $region74: #{tpu_custom_call.1} parent=59 // pred_check_branch
          %1876 = sbr.rel (%p1874) target = $region76
        $region75: #{tpu_custom_call.1} parent=59 // pred_region
          %s1877 = smul.u32 8, %s28
          %1879 = vsyncadd %s1870, 0
          %s1880 = smul.addr %s1877, 8
          %s1881 = scalar_lea.hbm %s10, %s1880
          %s1882 = sshll.u32 %s1873, 4
          %s1883 = int_to_ptr.vmem [resolvable:$true] %s1882
          %s1884 = sshll.u32 %s1881, 4
          %s1885 = int_to_ptr.hbm [resolvable:$true] %s1884
          %1890 = dma.vmem_to_hbm [thread:$0]  %s1883, 1024, %s1885, %s1870, 128, 128, 8
        $region76: #{tpu_custom_call.1} parent=59 // pred_fallthru
          _
      $region60: #{tpu_custom_call.1} parent=5 // pred_fallthru
        _
      %p1891 = scmp.le.s32.totalorder 2, %s23
      // Predicated region
      $region77: #{tpu_custom_call.1} parent=5 // pred_check
        %p1892 = pneg %p1891
      $region78: #{tpu_custom_call.1} parent=5 // pred_check_branch
        %1894 = sbr.rel (%p1892) target = $region80
      $region79: #{tpu_custom_call.1} parent=5 // pred_region
        %s1895 = ssub.s32 %s23, 2
        // Predicated region
        $region81: #{tpu_custom_call.1} parent=79 // pred_check
          %p1896 = pneg %p277
        $region82: #{tpu_custom_call.1} parent=79 // pred_check_branch
          %1898 = sbr.rel (%p1896) target = $region84
        $region83: #{tpu_custom_call.1} parent=79 // pred_region
          %s1899 = sand.u32 %s262, 1
          %s1900 = scalar_lea.sflag [#allocation4], %s1899
          %s1901 = sand.u32 %s262, 1
          %s1902 = smul.addr %s1901, 64
          %s1903 = scalar_lea.vmem [#allocation8], %s1902
          %1905 = dma.done %s1900, 1024
        $region84: #{tpu_custom_call.1} parent=79 // pred_fallthru
          _
      $region80: #{tpu_custom_call.1} parent=5 // pred_fallthru
        _
    $region6: #{tpu_custom_call.1} parent=1 // loop_footer
      %s27 = sadd.s32 1, %s23
    $region7: #{tpu_custom_call.1} parent=1 // loop_footer_branch
      %22 = sbr.rel target = $region3
    $region8: #{tpu_custom_call.1} parent=1 // loop_exit
      _
    %1906 = vsyncpa [#allocation3], 1
    %s1907 = scalar_lea.sflag [#allocation3], 1
    %1908 = vsyncpa %s1907, 1
    %1909 = vsyncpa [#allocation6], 1
    %1910 = vsyncpa [#allocation4], 1
    %s1911 = scalar_lea.sflag [#allocation4], 1
    %1912 = vsyncpa %s1911, 1

</llo_original>
